<compile_context>
chip_gen: v7x
topology: tpu7x:2x2x1
jax: 0.10.0
libtpu: 0.0.40
codegen_flags: <defaults>
</compile_context>

<pallas_src>
import math
import jax
import jax.numpy as jnp
from jax.experimental import pallas as pl
from jax.experimental.pallas import tpu as pltpu


def siren_kernel(x_ref, win_ref, bin_ref, wh_ref, bh_ref, wout_ref, bout_ref, o_ref):
    # x_ref:    (in_f, TB)     batch on lanes
    # win_ref:  (H, in_f)      bin_ref:  (H, 1)
    # wh_ref:   (L, H, H)      bh_ref:   (L, H, 1)
    # wout_ref: (out_f, H)     bout_ref: (out_f, 1)
    # o_ref:    (out_f, TB)
    in_f = x_ref.shape[0]

    # Hoist full tile loads once (avoid re-materializing ref loads per FMA).
    x = x_ref[...]                                        # (in_f, TB)
    w_in = win_ref[...]                                   # (H, in_f)

    # --- input layer: tiny K (=2) contraction -> VPU broadcast FMAs (no MXU)
    h = bin_ref[...]                                      # (H, 1) broadcasts on lanes
    for k in range(in_f):                                 # static, in_f is tiny
        h = h + w_in[:, k:k + 1] * x[k:k + 1, :]          # -> (H, TB)

    # --- hidden layers: h = sin(W_l @ h + b_l); lane (batch) axis stays dense
    num_hidden = wh_ref.shape[0]
    for l in range(num_hidden):   # static unroll; L is small for Siren nets
        h = jnp.dot(wh_ref[l], h, preferred_element_type=jnp.float32) + bh_ref[l]
        h = jnp.sin(h)

    # --- output layer: (out_f, H) @ (H, TB) -> lane-dense (out_f, TB) store
    y = jnp.dot(wout_ref[...], h, preferred_element_type=jnp.float32) + bout_ref[...]
    o_ref[...] = y.astype(o_ref.dtype)


def _default_tile_b(B):
    """Lane-aligned batch tile: large for throughput, >=2 grid steps when possible."""
    if B >= 16384:
        return 8192
    if B >= 256:
        # Keep at least 2 grid steps so a 'parallel' axis can be split across cores.
        return max(128, (((B + 1) // 2) // 128) * 128)
    return 128


def siren_net_pallas(x, params, *, tile_b=None):
    """x: (B, in_features) float32.  params: PyTorch-layout weights (see init)."""
    B, in_f = x.shape
    win, b_in = params["win"], params["bin"]          # (H, in_f), (H, 1)
    wh, bh = params["wh"], params["bh"]               # (L, H, H), (L, H, 1)
    wout, b_out = params["wout"], params["bout"]      # (out_f, H), (out_f, 1)
    H = win.shape[0]
    L = wh.shape[0]
    out_f = wout.shape[0]

    if tile_b is None:
        tile_b = _default_tile_b(B)
    assert tile_b % 128 == 0, "tile_b must be a multiple of 128 (lane width)"

    # Pad batch so the lane-axis block is a clean multiple of tile_b.
    n_tiles = pl.cdiv(B, tile_b)
    B_pad = n_tiles * tile_b
    x_t = x.T                                          # (in_f, B) — batch on lanes
    if B_pad != B:
        x_t = jnp.pad(x_t, ((0, 0), (0, B_pad - B)))

    out_t = pl.pallas_call(
        siren_kernel,
        out_shape=jax.ShapeDtypeStruct((out_f, B_pad), x.dtype),
        grid_spec=pltpu.PrefetchScalarGridSpec(
            num_scalar_prefetch=0,
            grid=(n_tiles,),
            in_specs=[
                pl.BlockSpec((in_f, tile_b), lambda i: (0, i)),     # x (batch on lanes)
                pl.BlockSpec((H, in_f), lambda i: (0, 0)),          # W_in   (grid-invariant)
                pl.BlockSpec((H, 1), lambda i: (0, 0)),             # b_in
                pl.BlockSpec((L, H, H), lambda i: (0, 0, 0)),       # W_hidden
                pl.BlockSpec((L, H, 1), lambda i: (0, 0, 0)),       # b_hidden
                pl.BlockSpec((out_f, H), lambda i: (0, 0)),         # W_out
                pl.BlockSpec((out_f, 1), lambda i: (0, 0)),         # b_out
            ],
            out_specs=pl.BlockSpec((out_f, tile_b), lambda i: (0, i)),  # lane-dense store
        ),
        compiler_params=pltpu.CompilerParams(
            dimension_semantics=("parallel",)),
    )(x_t, win, b_in, wh, bh, wout, b_out)

    return out_t[:, :B].T                              # back to (B, out_f)


def init_siren_params(key, in_features, out_features, hidden_features,
                      num_hidden_layers, w0=30.0):
    """Deterministic Siren-style init, PyTorch (out, in) weight layout.

    - all Linear weights ~ U(-sqrt(6/fan_in), sqrt(6/fan_in))   (Siren_Weight_init)
    - linear_in weight then overridden ~ U(-w0/in, w0/in)
    - biases keep PyTorch default: U(-1/sqrt(fan_in), 1/sqrt(fan_in))
    """
    ks = jax.random.split(key, 2 * (num_hidden_layers + 2))
    ki = iter(ks)

    def unif(k, shape, bound):
        return jax.random.uniform(k, shape, jnp.float32, -bound, bound)

    win = unif(next(ki), (hidden_features, in_features), w0 / in_features)
    b_in = unif(next(ki), (hidden_features, 1), 1.0 / math.sqrt(in_features))

    bound_h = math.sqrt(6.0 / hidden_features)
    wh, bh = [], []
    for _ in range(num_hidden_layers):
        wh.append(unif(next(ki), (hidden_features, hidden_features), bound_h))
        bh.append(unif(next(ki), (hidden_features, 1),
                       1.0 / math.sqrt(hidden_features)))
    wh = jnp.stack(wh, axis=0)                         # (L, H, H)
    bh = jnp.stack(bh, axis=0)                         # (L, H, 1)

    wout = unif(next(ki), (out_features, hidden_features), bound_h)
    b_out = unif(next(ki), (out_features, 1), 1.0 / math.sqrt(hidden_features))

    return {"win": win, "bin": b_in, "wh": wh, "bh": bh,
            "wout": wout, "bout": b_out}


def siren_net_ref(x, params):
    """Pure-JAX reference of the PyTorch forward for verification."""
    hp = jax.lax.Precision.HIGHEST
    h = jnp.dot(x, params["win"].T, precision=hp) + params["bin"].T
    for l in range(params["wh"].shape[0]):
        h = jnp.sin(jnp.dot(h, params["wh"][l].T, precision=hp) + params["bh"][l].T)
    return jnp.dot(h, params["wout"].T, precision=hp) + params["bout"].T


if __name__ == "__main__":
    key = jax.random.PRNGKey(0)
    k_param, k_x = jax.random.split(key)

    in_features = 2
    out_features = 1
    hidden_features = 32
    num_hidden_layers = 3
    batch = 16

    params = init_siren_params(k_param, in_features, out_features,
                               hidden_features, num_hidden_layers, w0=30.0)
    x = jax.random.uniform(k_x, (batch, in_features), jnp.float32, -1.0, 1.0)

    y = siren_net_pallas(x, params)        # auto tile_b (128 here; larger for big B)
    y = jax.block_until_ready(y)

    y_ref = siren_net_ref(x, params)
    assert y.shape == (batch, out_features)
    assert jnp.allclose(y, y_ref, atol=1e-4, rtol=1e-4), "mismatch vs reference"

    print("KERNEL_OK")
</pallas_src>

<mosaic_0001>
module attributes {stable_mosaic.version = 11 : i64} {
  func.func @siren_kernel(%arg0: i32, %arg1: memref<2x128xf32, #tpu.memory_space<vmem>>, %arg2: memref<32x2xf32, #tpu.memory_space<vmem>>, %arg3: memref<32x1xf32, #tpu.memory_space<vmem>>, %arg4: memref<3x32x32xf32, #tpu.memory_space<vmem>>, %arg5: memref<3x32x1xf32, #tpu.memory_space<vmem>>, %arg6: memref<1x32xf32, #tpu.memory_space<vmem>>, %arg7: memref<1x1xf32, #tpu.memory_space<vmem>>, %arg8: memref<1x128xf32, #tpu.memory_space<vmem>>) attributes {dimension_semantics = [#tpu.dimension_semantics<parallel>], iteration_bounds = array<i64: 1>, scalar_prefetch = 0 : i64, scratch_operands = 0 : i64, tpu.core_type = #tpu.core_type<tc>, window_params = [{transform_indices = @transform_0, window_bounds = array<i64: 2, 128>}, {pipeline_mode = #tpu.pipeline_mode<synchronous>, transform_indices = @transform_1, window_bounds = array<i64: 32, 2>}, {pipeline_mode = #tpu.pipeline_mode<synchronous>, transform_indices = @transform_2, window_bounds = array<i64: 32, 1>}, {pipeline_mode = #tpu.pipeline_mode<synchronous>, transform_indices = @transform_3, window_bounds = array<i64: 3, 32, 32>}, {pipeline_mode = #tpu.pipeline_mode<synchronous>, transform_indices = @transform_4, window_bounds = array<i64: 3, 32, 1>}, {pipeline_mode = #tpu.pipeline_mode<synchronous>, transform_indices = @transform_5, window_bounds = array<i64: 1, 32>}, {pipeline_mode = #tpu.pipeline_mode<synchronous>, transform_indices = @transform_6, window_bounds = array<i64: 1, 1>}, {transform_indices = @transform_7, window_bounds = array<i64: 1, 128>}]} {
    %c0 = arith.constant 0 : index
    %c0_0 = arith.constant 0 : index
    %0 = vector.load %arg1[%c0, %c0_0] : memref<2x128xf32, #tpu.memory_space<vmem>>, vector<2x128xf32>
    %c0_1 = arith.constant 0 : index
    %c0_2 = arith.constant 0 : index
    %1 = vector.load %arg2[%c0_1, %c0_2] : memref<32x2xf32, #tpu.memory_space<vmem>>, vector<32x2xf32>
    %c0_3 = arith.constant 0 : index
    %c0_4 = arith.constant 0 : index
    %2 = vector.load %arg3[%c0_3, %c0_4] : memref<32x1xf32, #tpu.memory_space<vmem>>, vector<32x1xf32>
    %3 = vector.extract_strided_slice %1 {offsets = [0, 0], sizes = [32, 1], strides = [1, 1]} : vector<32x2xf32> to vector<32x1xf32>
    %4 = vector.extract_strided_slice %0 {offsets = [0, 0], sizes = [1, 128], strides = [1, 1]} : vector<2x128xf32> to vector<1x128xf32>
    %5 = vector.broadcast %3 : vector<32x1xf32> to vector<32x128xf32>
    %6 = vector.broadcast %4 : vector<1x128xf32> to vector<32x128xf32>
    %7 = arith.mulf %5, %6 : vector<32x128xf32>
    %8 = vector.broadcast %2 : vector<32x1xf32> to vector<32x128xf32>
    %9 = arith.addf %8, %7 : vector<32x128xf32>
    %10 = vector.extract_strided_slice %1 {offsets = [0, 1], sizes = [32, 1], strides = [1, 1]} : vector<32x2xf32> to vector<32x1xf32>
    %11 = vector.extract_strided_slice %0 {offsets = [1, 0], sizes = [1, 128], strides = [1, 1]} : vector<2x128xf32> to vector<1x128xf32>
    %12 = vector.broadcast %10 : vector<32x1xf32> to vector<32x128xf32>
    %13 = vector.broadcast %11 : vector<1x128xf32> to vector<32x128xf32>
    %14 = arith.mulf %12, %13 : vector<32x128xf32>
    %15 = arith.addf %9, %14 : vector<32x128xf32>
    %c0_5 = arith.constant 0 : index
    %c0_6 = arith.constant 0 : index
    %c0_7 = arith.constant 0 : index
    %16 = vector.load %arg4[%c0_5, %c0_6, %c0_7] : memref<3x32x32xf32, #tpu.memory_space<vmem>>, vector<1x32x32xf32>
    %17 = vector.shape_cast %16 : vector<1x32x32xf32> to vector<32x32xf32>
    %cst = arith.constant dense<0.000000e+00> : vector<32x128xf32>
    %18 = tpu.matmul %17, %15, %cst {dimension_numbers = #tpu.dot_dimension_numbers<[1], [0], [0], [1], [0, 0, 1, 1], [], []>} : vector<32x32xf32>, vector<32x128xf32>, vector<32x128xf32> -> vector<32x128xf32>
    %c0_8 = arith.constant 0 : index
    %c0_9 = arith.constant 0 : index
    %c0_10 = arith.constant 0 : index
    %19 = vector.load %arg5[%c0_8, %c0_9, %c0_10] : memref<3x32x1xf32, #tpu.memory_space<vmem>>, vector<1x32x1xf32>
    %20 = vector.shape_cast %19 : vector<1x32x1xf32> to vector<32x1xf32>
    %21 = vector.broadcast %20 : vector<32x1xf32> to vector<32x128xf32>
    %22 = arith.addf %18, %21 : vector<32x128xf32>
    %23 = math.sin %22 : vector<32x128xf32>
    %c1 = arith.constant 1 : index
    %c0_11 = arith.constant 0 : index
    %c0_12 = arith.constant 0 : index
    %24 = vector.load %arg4[%c1, %c0_11, %c0_12] : memref<3x32x32xf32, #tpu.memory_space<vmem>>, vector<1x32x32xf32>
    %25 = vector.shape_cast %24 : vector<1x32x32xf32> to vector<32x32xf32>
    %cst_13 = arith.constant dense<0.000000e+00> : vector<32x128xf32>
    %26 = tpu.matmul %25, %23, %cst_13 {dimension_numbers = #tpu.dot_dimension_numbers<[1], [0], [0], [1], [0, 0, 1, 1], [], []>} : vector<32x32xf32>, vector<32x128xf32>, vector<32x128xf32> -> vector<32x128xf32>
    %c1_14 = arith.constant 1 : index
    %c0_15 = arith.constant 0 : index
    %c0_16 = arith.constant 0 : index
    %27 = vector.load %arg5[%c1_14, %c0_15, %c0_16] : memref<3x32x1xf32, #tpu.memory_space<vmem>>, vector<1x32x1xf32>
    %28 = vector.shape_cast %27 : vector<1x32x1xf32> to vector<32x1xf32>
    %29 = vector.broadcast %28 : vector<32x1xf32> to vector<32x128xf32>
    %30 = arith.addf %26, %29 : vector<32x128xf32>
    %31 = math.sin %30 : vector<32x128xf32>
    %c2 = arith.constant 2 : index
    %c0_17 = arith.constant 0 : index
    %c0_18 = arith.constant 0 : index
    %32 = vector.load %arg4[%c2, %c0_17, %c0_18] : memref<3x32x32xf32, #tpu.memory_space<vmem>>, vector<1x32x32xf32>
    %33 = vector.shape_cast %32 : vector<1x32x32xf32> to vector<32x32xf32>
    %cst_19 = arith.constant dense<0.000000e+00> : vector<32x128xf32>
    %34 = tpu.matmul %33, %31, %cst_19 {dimension_numbers = #tpu.dot_dimension_numbers<[1], [0], [0], [1], [0, 0, 1, 1], [], []>} : vector<32x32xf32>, vector<32x128xf32>, vector<32x128xf32> -> vector<32x128xf32>
    %c2_20 = arith.constant 2 : index
    %c0_21 = arith.constant 0 : index
    %c0_22 = arith.constant 0 : index
    %35 = vector.load %arg5[%c2_20, %c0_21, %c0_22] : memref<3x32x1xf32, #tpu.memory_space<vmem>>, vector<1x32x1xf32>
    %36 = vector.shape_cast %35 : vector<1x32x1xf32> to vector<32x1xf32>
    %37 = vector.broadcast %36 : vector<32x1xf32> to vector<32x128xf32>
    %38 = arith.addf %34, %37 : vector<32x128xf32>
    %39 = math.sin %38 : vector<32x128xf32>
    %c0_23 = arith.constant 0 : index
    %c0_24 = arith.constant 0 : index
    %40 = vector.load %arg6[%c0_23, %c0_24] : memref<1x32xf32, #tpu.memory_space<vmem>>, vector<1x32xf32>
    %cst_25 = arith.constant dense<0.000000e+00> : vector<1x128xf32>
    %41 = tpu.matmul %40, %39, %cst_25 {dimension_numbers = #tpu.dot_dimension_numbers<[1], [0], [0], [1], [0, 0, 1, 1], [], []>} : vector<1x32xf32>, vector<32x128xf32>, vector<1x128xf32> -> vector<1x128xf32>
    %c0_26 = arith.constant 0 : index
    %c0_27 = arith.constant 0 : index
    %42 = vector.load %arg7[%c0_26, %c0_27] : memref<1x1xf32, #tpu.memory_space<vmem>>, vector<1x1xf32>
    %43 = vector.broadcast %42 : vector<1x1xf32> to vector<1x128xf32>
    %44 = arith.addf %41, %43 : vector<1x128xf32>
    %c0_28 = arith.constant 0 : index
    %c0_29 = arith.constant 0 : index
    %45 = vector.load %arg8[%c0_28, %c0_29] : memref<1x128xf32, #tpu.memory_space<vmem>>, vector<1x128xf32>
    tpu.vector_store %arg8[%c0_28, %c0_29], %44 {strides = array<i32>} : memref<1x128xf32, #tpu.memory_space<vmem>>, vector<1x128xf32>,
    return
  }
  func.func @transform_0(%arg0: i32) -> (i32, i32) {
    %c0_i32 = arith.constant 0 : i32
    %c0_i32_0 = arith.constant 0 : i32
    return %c0_i32, %arg0 : i32, i32
  }
  func.func @transform_1(%arg0: i32) -> (i32, i32) {
    %c0_i32 = arith.constant 0 : i32
    %c0_i32_0 = arith.constant 0 : i32
    %c0_i32_1 = arith.constant 0 : i32
    return %c0_i32, %c0_i32_0 : i32, i32
  }
  func.func @transform_2(%arg0: i32) -> (i32, i32) {
    %c0_i32 = arith.constant 0 : i32
    %c0_i32_0 = arith.constant 0 : i32
    %c0_i32_1 = arith.constant 0 : i32
    return %c0_i32, %c0_i32_0 : i32, i32
  }
  func.func @transform_3(%arg0: i32) -> (i32, i32, i32) {
    %c0_i32 = arith.constant 0 : i32
    %c0_i32_0 = arith.constant 0 : i32
    %c0_i32_1 = arith.constant 0 : i32
    %c0_i32_2 = arith.constant 0 : i32
    return %c0_i32, %c0_i32_0, %c0_i32_1 : i32, i32, i32
  }
  func.func @transform_4(%arg0: i32) -> (i32, i32, i32) {
    %c0_i32 = arith.constant 0 : i32
    %c0_i32_0 = arith.constant 0 : i32
    %c0_i32_1 = arith.constant 0 : i32
    %c0_i32_2 = arith.constant 0 : i32
    return %c0_i32, %c0_i32_0, %c0_i32_1 : i32, i32, i32
  }
  func.func @transform_5(%arg0: i32) -> (i32, i32) {
    %c0_i32 = arith.constant 0 : i32
    %c0_i32_0 = arith.constant 0 : i32
    %c0_i32_1 = arith.constant 0 : i32
    return %c0_i32, %c0_i32_0 : i32, i32
  }
  func.func @transform_6(%arg0: i32) -> (i32, i32) {
    %c0_i32 = arith.constant 0 : i32
    %c0_i32_0 = arith.constant 0 : i32
    %c0_i32_1 = arith.constant 0 : i32
    return %c0_i32, %c0_i32_0 : i32, i32
  }
  func.func @transform_7(%arg0: i32) -> (i32, i32) {
    %c0_i32 = arith.constant 0 : i32
    %c0_i32_0 = arith.constant 0 : i32
    return %c0_i32, %arg0 : i32, i32
  }
}

</mosaic_0001>

<llo_original>
// kernel: tpu_custom_call.1
$region0: #{tpu_custom_call.1}
  #allocation0 [shape = 'u32[]', space=smem, size = 0x4, offset = 0x4, fixed_abs, tag = 'smem constant byte address 0x4 - core index']
  #allocation1 [shape = 'u32[144,128]{1,0:T(1,128)}', space=vmem, size = 0x12000, scoped, tag = 'internal scratch']
  #allocation2 [shape = 'f32[1,1]{1,0:T(1,128)S(1)}', space=vmem, size = 0x200, scoped, tag = 'scoped memory for tpu_custom_call.1']
  %s0 = inlined_call_operand.vmem [shape: f32[2,128], index: 0, kind: input, shape index: {}]
  %s1 = inlined_call_operand.vmem [shape: f32[32,2], index: 1, kind: input, shape index: {}]
  %s2 = inlined_call_operand.vmem [shape: f32[32,1], index: 2, kind: input, shape index: {}]
  %s3 = inlined_call_operand.vmem [shape: f32[3,32,32], index: 3, kind: input, shape index: {}]
  %s4 = inlined_call_operand.vmem [shape: f32[3,32,1], index: 4, kind: input, shape index: {}]
  %s5 = inlined_call_operand.vmem [shape: f32[1,32], index: 5, kind: input, shape index: {}]
  %s6 = inlined_call_operand.<no memory space> [shape: f32[1,1], index: 6, kind: input, shape index: {}]
  %s7 = inlined_call_operand.hbm [shape: f32[1,128], index: 7, kind: output, shape index: {}]
  %s8 = sld [smem:[#allocation0]]
  $region38: #{tpu_custom_call.1} parent=0
    _
  %s10 = ssub.s32 1, %s8
  %s11 = scalar_select 0, %s10, %s8
  %v12 = vstv %s6
  %13 = vst [vmem:[#allocation2] sm:$0x1] %v12
  $region1: #{tpu_custom_call.1} parent=0
    #allocation3 [shape = 'u8[512]{0}', space=vmem, size = 0x400, scoped, tag = 'output window, operand 0, single buffered']
    #allocation4 [shape = 's32[1]{0}', space=sflag, size = 0x4, scoped, tag = 'scoped memory for tpu_custom_call.1']
    %14 = vsyncpa [#allocation4], 0
    // Predicated region
    $region2: #{tpu_custom_call.1} parent=1 // pred_check
      _
    $region3: #{tpu_custom_call.1} parent=1 // pred_check_branch
      %16 = sbr.rel (0) target = $region5
    $region4: #{tpu_custom_call.1} parent=1 // pred_region
      _
    $region5: #{tpu_custom_call.1} parent=1 // pred_fallthru
      _
    // Predicated region
    $region6: #{tpu_custom_call.1} parent=1 // pred_check
      _
    $region7: #{tpu_custom_call.1} parent=1 // pred_check_branch
      %18 = sbr.rel (0) target = $region9
    $region8: #{tpu_custom_call.1} parent=1 // pred_region
      _
    $region9: #{tpu_custom_call.1} parent=1 // pred_fallthru
      _
    // Predicated region
    $region10: #{tpu_custom_call.1} parent=1 // pred_check
      _
    $region11: #{tpu_custom_call.1} parent=1 // pred_check_branch
      %20 = sbr.rel (0) target = $region13
    $region12: #{tpu_custom_call.1} parent=1 // pred_region
      _
    $region13: #{tpu_custom_call.1} parent=1 // pred_fallthru
      _
    // Predicated region
    $region14: #{tpu_custom_call.1} parent=1 // pred_check
      _
    $region15: #{tpu_custom_call.1} parent=1 // pred_check_branch
      %22 = sbr.rel (0) target = $region17
    $region16: #{tpu_custom_call.1} parent=1 // pred_region
      _
    $region17: #{tpu_custom_call.1} parent=1 // pred_fallthru
      _
    // Predicated region
    $region18: #{tpu_custom_call.1} parent=1 // pred_check
      _
    $region19: #{tpu_custom_call.1} parent=1 // pred_check_branch
      %24 = sbr.rel (0) target = $region21
    $region20: #{tpu_custom_call.1} parent=1 // pred_region
      _
    $region21: #{tpu_custom_call.1} parent=1 // pred_fallthru
      _
    // Predicated region
    $region22: #{tpu_custom_call.1} parent=1 // pred_check
      _
    $region23: #{tpu_custom_call.1} parent=1 // pred_check_branch
      %26 = sbr.rel (0) target = $region25
    $region24: #{tpu_custom_call.1} parent=1 // pred_region
      _
    $region25: #{tpu_custom_call.1} parent=1 // pred_fallthru
      _
    // Predicated region
    $region26: #{tpu_custom_call.1} parent=1 // pred_check
      _
    $region27: #{tpu_custom_call.1} parent=1 // pred_check_branch
      %28 = sbr.rel (0) target = $region29
    $region28: #{tpu_custom_call.1} parent=1 // pred_region
      _
    $region29: #{tpu_custom_call.1} parent=1 // pred_fallthru
      _
    %v29 = vld [vmem:[%s0] sm:$0x3]
    %v30 = vld [vmem:[%s1] sm:$0xff]
    %v31 = vld [vmem:[%s1 + $0x8] sm:$0xff]
    %v32 = vld [vmem:[%s1 + $0x10] sm:$0xff]
    %v33 = vld [vmem:[%s1 + $0x18] sm:$0xff]
    %v34 = vld [vmem:[%s2] sm:$0xff]
    %v35 = vld [vmem:[%s2 + $0x8] sm:$0xff]
    %v36 = vld [vmem:[%s2 + $0x10] sm:$0xff]
    %v37 = vld [vmem:[%s2 + $0x18] sm:$0xff]
    %39 = vset.pattern.permute.xlu0 0
    %40 = vperm.xlu0 %39, %v30
    %v41 = vpop.permute.xlu0 %40
    %44 = vset.pattern.permute.xlu0 0
    %45 = vperm.xlu0 %44, %v31
    %v46 = vpop.permute.xlu0 %45
    %49 = vset.pattern.permute.xlu0 0
    %50 = vperm.xlu0 %49, %v32
    %v51 = vpop.permute.xlu0 %50
    %54 = vset.pattern.permute.xlu0 0
    %55 = vperm.xlu0 %54, %v33
    %v56 = vpop.permute.xlu0 %55
    %v58 = vlaneseq
    %v59 = vshrl.u32 %v58, 7
    %v60 = vsub.s32 0, %v59
    %v61 = vrot.slane %v29, %v60
    %v62 = vmul.f32 %v41, %v61
    %v63 = vmul.f32 %v46, %v61
    %v64 = vmul.f32 %v51, %v61
    %v65 = vmul.f32 %v56, %v61
    %67 = vset.pattern.permute.xlu0 0
    %68 = vperm.xlu0 %67, %v34
    %v69 = vpop.permute.xlu0 %68
    %72 = vset.pattern.permute.xlu0 0
    %73 = vperm.xlu0 %72, %v35
    %v74 = vpop.permute.xlu0 %73
    %77 = vset.pattern.permute.xlu0 0
    %78 = vperm.xlu0 %77, %v36
    %v79 = vpop.permute.xlu0 %78
    %82 = vset.pattern.permute.xlu0 0
    %83 = vperm.xlu0 %82, %v37
    %v84 = vpop.permute.xlu0 %83
    %v86 = vadd.f32 %v69, %v62
    %v87 = vadd.f32 %v74, %v63
    %v88 = vadd.f32 %v79, %v64
    %v89 = vadd.f32 %v84, %v65
    %90 = vset.pattern.permute.xlu0 1
    %91 = vperm.xlu0 %90, %v30
    %v92 = vpop.permute.xlu0 %91
    %94 = vset.pattern.permute.xlu0 1
    %95 = vperm.xlu0 %94, %v31
    %v96 = vpop.permute.xlu0 %95
    %98 = vset.pattern.permute.xlu0 1
    %99 = vperm.xlu0 %98, %v32
    %v100 = vpop.permute.xlu0 %99
    %102 = vset.pattern.permute.xlu0 1
    %103 = vperm.xlu0 %102, %v33
    %v104 = vpop.permute.xlu0 %103
    %v106 = vlaneseq
    %v107 = vshrl.u32 %v106, 7
    %v108 = vsub.s32 1, %v107
    %v109 = vrot.slane %v29, %v108
    %v110 = vmul.f32 %v92, %v109
    %v111 = vmul.f32 %v96, %v109
    %v112 = vmul.f32 %v100, %v109
    %v113 = vmul.f32 %v104, %v109
    %v114 = vadd.f32 %v86, %v110
    %v115 = vadd.f32 %v87, %v111
    %v116 = vadd.f32 %v88, %v112
    %v117 = vadd.f32 %v89, %v113
    %v118 = vld [vmem:[%s3] sm:$0xff]
    %v119 = vld [vmem:[%s3 + $0x8] sm:$0xff]
    %v120 = vld [vmem:[%s3 + $0x10] sm:$0xff]
    %v121 = vld [vmem:[%s3 + $0x18] sm:$0xff]
    %v122 = vld [vmem:[%s4] sm:$0xff]
    %v123 = vld [vmem:[%s4 + $0x8] sm:$0xff]
    %v124 = vld [vmem:[%s4 + $0x10] sm:$0xff]
    %v125 = vld [vmem:[%s4 + $0x18] sm:$0xff]
    %127 = vset.pattern.permute.xlu0 0
    %128 = vperm.xlu0 %127, %v122
    %v129 = vpop.permute.xlu0 %128
    %132 = vset.pattern.permute.xlu0 0
    %133 = vperm.xlu0 %132, %v123
    %v134 = vpop.permute.xlu0 %133
    %137 = vset.pattern.permute.xlu0 0
    %138 = vperm.xlu0 %137, %v124
    %v139 = vpop.permute.xlu0 %138
    %142 = vset.pattern.permute.xlu0 0
    %143 = vperm.xlu0 %142, %v125
    %v144 = vpop.permute.xlu0 %143
    %vm146 = vcmask 261120
    %v148 = vsel %vm146, %v118, 0
    %v151 = vsel %vm146, %v119, 0
    %v154 = vsel %vm146, %v120, 0
    %v157 = vsel %vm146, %v121, 0
    %159 = vmatprep.subr.mxu0 0.0
    %160 = vmatpush1.msra.mxu0 %v114
    %161 = vmatprep.subr.mxu0 0.0
    %162 = vmatpush1.msra.mxu0 %v115
    %163 = vmatprep.subr.mxu0 0.0
    %164 = vmatpush1.msra.mxu0 %v116
    %165 = vmatprep.subr.mxu0 0.0
    %166 = vmatpush1.msra.mxu0 %v117
    %167 = vmatprep.subr.mxu0 0.0
    %168 = vmatpush1.msra.mxu0 0.0
    %169 = vmatprep.subr.mxu0 0.0
    %170 = vmatpush1.msra.mxu0 0.0
    %171 = vmatprep.subr.mxu0 0.0
    %172 = vmatpush1.msra.mxu0 0.0
    %173 = vmatprep.subr.mxu0 0.0
    %174 = vmatpush1.msra.mxu0 0.0
    %175 = vmatprep.subr.mxu0 0.0
    %176 = vmatpush1.msra.mxu0 0.0
    %177 = vmatprep.subr.mxu0 0.0
    %178 = vmatpush1.msra.mxu0 0.0
    %179 = vmatprep.subr.mxu0 0.0
    %180 = vmatpush1.msra.mxu0 0.0
    %181 = vmatprep.subr.mxu0 0.0
    %182 = vmatpush1.msra.mxu0 0.0
    %183 = vmatprep.subr.mxu0 0.0
    %184 = vmatpush1.msra.mxu0 0.0
    %185 = vmatprep.subr.mxu0 0.0
    %186 = vmatpush1.msra.mxu0 0.0
    %187 = vmatprep.subr.mxu0 0.0
    %188 = vmatpush1.msra.mxu0 0.0
    %189 = vmatprep.subr.mxu0 0.0
    %190 = vmatpush1.msra.mxu0 0.0
    %191 = vmatprep.subr.mxu0 0.0
    %192 = vmatpush1.msra.mxu0 0.0
    %193 = vmatprep.subr.mxu0 0.0
    %194 = vmatpush1.msra.mxu0 0.0
    %195 = vmatprep.subr.mxu0 0.0
    %196 = vmatpush1.msra.mxu0 0.0
    %197 = vmatprep.subr.mxu0 0.0
    %198 = vmatpush1.msra.mxu0 0.0
    %199 = vmatprep.subr.mxu0 0.0
    %200 = vmatpush1.msra.mxu0 0.0
    %201 = vmatprep.subr.mxu0 0.0
    %202 = vmatpush1.msra.mxu0 0.0
    %203 = vmatprep.subr.mxu0 0.0
    %204 = vmatpush1.msra.mxu0 0.0
    %205 = vmatprep.subr.mxu0 0.0
    %206 = vmatpush1.msra.mxu0 0.0
    %207 = vmatprep.subr.mxu0 0.0
    %208 = vmatpush1.msra.mxu0 0.0
    %209 = vmatprep.subr.mxu0 0.0
    %210 = vmatpush1.msra.mxu0 0.0
    %211 = vmatprep.subr.mxu0 0.0
    %212 = vmatpush1.msra.mxu0 0.0
    %213 = vmatprep.subr.mxu0 0.0
    %214 = vmatpush1.msra.mxu0 0.0
    %215 = vmatprep.subr.mxu0 0.0
    %216 = vmatpush1.msra.mxu0 0.0
    %217 = vmatprep.subr.mxu0 0.0
    %218 = vmatpush1.msra.mxu0 0.0
    %219 = vmatprep.subr.mxu0 0.0
    %220 = vmatpush1.msra.mxu0 0.0
    %221 = vmatprep.subr.mxu0 0.0
    %222 = vmatpush1.msra.mxu0 0.0
    %223 = vmatprep.mubr.f32.mxu0 0.0
    %224 = vmatmul.mubr.f32.gmra.mrb[0].mxu0 %v148
    %v225 = vpop.f32.mrb[0].mxu0
    %v226 = vadd.f32 %v129, %v225
    %v227 = vpop.f32.mrb[0].mxu0
    %228 = vmatprep.mubr.f32.mxu0 0.0
    %229 = vmatmul.mubr.f32.gmra.mrb[0].mxu0 %v151
    %v230 = vpop.f32.mrb[0].mxu0
    %v231 = vadd.f32 %v134, %v230
    %v232 = vpop.f32.mrb[0].mxu0
    %233 = vmatprep.mubr.f32.mxu0 0.0
    %234 = vmatmul.mubr.f32.gmra.mrb[0].mxu0 %v154
    %v235 = vpop.f32.mrb[0].mxu0
    %v236 = vadd.f32 %v139, %v235
    %v237 = vpop.f32.mrb[0].mxu0
    %238 = vmatprep.mubr.f32.mxu0 0.0
    %239 = vmatmul.mubr.f32.gmra.mrb[0].mxu0 %v157
    %v240 = vpop.f32.mrb[0].mxu0
    %v241 = vadd.f32 %v144, %v240
    %v242 = vpop.f32.mrb[0].mxu0
    %243 = vdwg.mxu0
    %v244 = vand.u32 2147483647, %v226
    %vm245 = vcmp.le.f32.partialorder %v244, 0.7853982
    %vm246 = vcmp.lt.s32.totalorder %v226, 0
    %v247 = vand.u32 %v226, 2139095040
    %v248 = vshrl.u32 %v247, 23
    %v249 = vsub.s32 %v248, 127
    %v250 = vand.u32 2147483647, %v226
    %v251 = vand.u32 %v250, 8388607
    %v252 = vor.u32 %v251, 8388608
    %v253 = vsub.s32 0, %v252
    %v254 = vadd.s32 %v249, 1
    %vm255 = vcmp.gt.s32.totalorder %v254, 0
    %v256 = vsel %vm255, %v254, 0
    %v257 = vshrl.u32 %v256, 5
    %v258 = vand.u32 %v256, 31
    %v259 = vsub.s32 32, %v258
    %v260 = vshrl.u32 683565275, %v259
    %v261 = vshll.u32 683565275, %v258
    %v262 = vshrl.u32 2475754826, %v259
    %v263 = vor.u32 %v261, %v262
    %v264 = vshll.u32 2475754826, %v258
    %v265 = vshrl.u32 2131351028, %v259
    %v266 = vor.u32 %v264, %v265
    %v267 = vshll.u32 2131351028, %v258
    %v268 = vshrl.u32 2102212464, %v259
    %v269 = vor.u32 %v267, %v268
    %v270 = vshll.u32 2102212464, %v258
    %v271 = vshrl.u32 920167782, %v259
    %v272 = vor.u32 %v270, %v271
    %v273 = vshll.u32 920167782, %v258
    %v274 = vshrl.u32 1326507024, %v259
    %v275 = vor.u32 %v273, %v274
    %vm276 = vcmp.lt.s32.totalorder %v257, 1
    %vm277 = vcmp.lt.s32.totalorder %v257, 2
    %vm278 = vcmp.lt.s32.totalorder %v257, 3
    %vm279 = vcmp.lt.s32.totalorder %v257, 4
    %v280 = vsel %vm276, %v260, %v263
    %v281 = vsel %vm279, %v269, 2102212464
    %v282 = vsel %vm278, %v266, %v281
    %v283 = vsel %vm277, %v280, %v282
    %v284 = vsel %vm276, %v263, %v266
    %v285 = vsel %vm279, %v272, 920167782
    %v286 = vsel %vm278, %v269, %v285
    %v287 = vsel %vm277, %v284, %v286
    %v288 = vsel %vm276, %v266, %v269
    %v289 = vsel %vm279, %v275, 1326507024
    %v290 = vsel %vm278, %v272, %v289
    %v291 = vsel %vm277, %v288, %v290
    %v292 = vshll.u32 %v252, 8
    %v293 = vmul.u32.u64.compose %v292, %v291
    %v294 = vextract.low.u32 %v293
    %v295 = vextract.high.u32 %v293
    %v296 = vmul.u32.u64.compose %v292, %v287
    %v297 = vextract.low.u32 %v296
    %v298 = vextract.high.u32 %v296
    %v299 = vmul.u32 %v292, %v283
    %v300 = vadd.s32 %v295, %v297
    %vm301 = vc.u32 %v295, %v297
    %v302 = vadd.s32 %v298, 1
    %v303 = vsel %vm301, %v302, %v298
    %v304 = vadd.s32 %v299, %v303
    %v305 = vadd.s32 %v304, 536870912
    %v306 = vshrl.u32 %v305, 30
    %v307 = vshll.u32 %v306, 30
    %v308 = vsub.s32 %v304, %v307
    %vm309 = vcmp.lt.s32.totalorder %v308, 0
    %v310 = vsub.s32 0, %v308
    %v311 = vsel %vm309, %v310, %v308
    %v312 = vclz %v311
    %v313 = vsub.s32 %v312, 2
    %vm314 = vcmp.gt.s32.totalorder 0, %v313
    %v315 = vsel %vm314, 0, %v313
    %v316 = vsub.s32 32, %v315
    %v317 = vshll.u32 %v308, %v315
    %v318 = vshrl.u32 %v300, %v316
    %v319 = vor.u32 %v317, %v318
    %v320 = vsub.s32 4294967266, %v315
    %v321 = vadd.s32 %v320, 127
    %v322 = vshll.u32 %v321, 23
    %v323 = vor.u32 4788187, %v322
    %v324 = vand.u32 2147483647, %v323
    %v326 = vcvt.s32.f32 %v319
    %v327 = vmul.f32 %v326, %v324
    %v328 = vxor.u32 %v327, 2147483648
    %v329 = vsel %vm246, %v328, %v327
    %v330 = vsub.s32 4, %v306
    %v331 = vsel %vm246, %v330, %v306
    %v332 = vsel %vm245, %v226, %v329
    %v333 = vsel %vm245, 0, %v331
    %v334 = vcosq.f32.pop %v332
    %v335 = vsinq.f32.pop %v332
    %vm336 = vweird.f32 %v226
    %v337 = vadd.s32 %v333, 3
    %v338 = vand.u32 %v337, 3
    %vm339 = vcmp.lt.s32.totalorder %v338, 2
    %vm340 = vcmp.eq.s32.totalorder %v338, 0
    %v341 = vxor.u32 %v335, 2147483648
    %v342 = vsel %vm340, %v334, %v341
    %vm343 = vcmp.eq.s32.totalorder %v338, 2
    %v344 = vxor.u32 %v334, 2147483648
    %v345 = vsel %vm343, %v344, %v335
    %v346 = vsel %vm339, %v342, %v345
    %v347 = vsel %vm336, nan, %v346
    %v348 = vand.u32 2147483647, %v231
    %vm349 = vcmp.le.f32.partialorder %v348, 0.7853982
    %vm350 = vcmp.lt.s32.totalorder %v231, 0
    %v351 = vand.u32 %v231, 2139095040
    %v352 = vshrl.u32 %v351, 23
    %v353 = vsub.s32 %v352, 127
    %v354 = vand.u32 2147483647, %v231
    %v355 = vand.u32 %v354, 8388607
    %v356 = vor.u32 %v355, 8388608
    %v357 = vsub.s32 0, %v356
    %v358 = vadd.s32 %v353, 1
    %vm359 = vcmp.gt.s32.totalorder %v358, 0
    %v360 = vsel %vm359, %v358, 0
    %v361 = vshrl.u32 %v360, 5
    %v362 = vand.u32 %v360, 31
    %v363 = vsub.s32 32, %v362
    %v364 = vshrl.u32 683565275, %v363
    %v365 = vshll.u32 683565275, %v362
    %v366 = vshrl.u32 2475754826, %v363
    %v367 = vor.u32 %v365, %v366
    %v368 = vshll.u32 2475754826, %v362
    %v369 = vshrl.u32 2131351028, %v363
    %v370 = vor.u32 %v368, %v369
    %v371 = vshll.u32 2131351028, %v362
    %v372 = vshrl.u32 2102212464, %v363
    %v373 = vor.u32 %v371, %v372
    %v374 = vshll.u32 2102212464, %v362
    %v375 = vshrl.u32 920167782, %v363
    %v376 = vor.u32 %v374, %v375
    %v377 = vshll.u32 920167782, %v362
    %v378 = vshrl.u32 1326507024, %v363
    %v379 = vor.u32 %v377, %v378
    %vm380 = vcmp.lt.s32.totalorder %v361, 1
    %vm381 = vcmp.lt.s32.totalorder %v361, 2
    %vm382 = vcmp.lt.s32.totalorder %v361, 3
    %vm383 = vcmp.lt.s32.totalorder %v361, 4
    %v384 = vsel %vm380, %v364, %v367
    %v385 = vsel %vm383, %v373, 2102212464
    %v386 = vsel %vm382, %v370, %v385
    %v387 = vsel %vm381, %v384, %v386
    %v388 = vsel %vm380, %v367, %v370
    %v389 = vsel %vm383, %v376, 920167782
    %v390 = vsel %vm382, %v373, %v389
    %v391 = vsel %vm381, %v388, %v390
    %v392 = vsel %vm380, %v370, %v373
    %v393 = vsel %vm383, %v379, 1326507024
    %v394 = vsel %vm382, %v376, %v393
    %v395 = vsel %vm381, %v392, %v394
    %v396 = vshll.u32 %v356, 8
    %v397 = vmul.u32.u64.compose %v396, %v395
    %v398 = vextract.low.u32 %v397
    %v399 = vextract.high.u32 %v397
    %v400 = vmul.u32.u64.compose %v396, %v391
    %v401 = vextract.low.u32 %v400
    %v402 = vextract.high.u32 %v400
    %v403 = vmul.u32 %v396, %v387
    %v404 = vadd.s32 %v399, %v401
    %vm405 = vc.u32 %v399, %v401
    %v406 = vadd.s32 %v402, 1
    %v407 = vsel %vm405, %v406, %v402
    %v408 = vadd.s32 %v403, %v407
    %v409 = vadd.s32 %v408, 536870912
    %v410 = vshrl.u32 %v409, 30
    %v411 = vshll.u32 %v410, 30
    %v412 = vsub.s32 %v408, %v411
    %vm413 = vcmp.lt.s32.totalorder %v412, 0
    %v414 = vsub.s32 0, %v412
    %v415 = vsel %vm413, %v414, %v412
    %v416 = vclz %v415
    %v417 = vsub.s32 %v416, 2
    %vm418 = vcmp.gt.s32.totalorder 0, %v417
    %v419 = vsel %vm418, 0, %v417
    %v420 = vsub.s32 32, %v419
    %v421 = vshll.u32 %v412, %v419
    %v422 = vshrl.u32 %v404, %v420
    %v423 = vor.u32 %v421, %v422
    %v424 = vsub.s32 4294967266, %v419
    %v425 = vadd.s32 %v424, 127
    %v426 = vshll.u32 %v425, 23
    %v427 = vor.u32 4788187, %v426
    %v428 = vand.u32 2147483647, %v427
    %v430 = vcvt.s32.f32 %v423
    %v431 = vmul.f32 %v430, %v428
    %v432 = vxor.u32 %v431, 2147483648
    %v433 = vsel %vm350, %v432, %v431
    %v434 = vsub.s32 4, %v410
    %v435 = vsel %vm350, %v434, %v410
    %v436 = vsel %vm349, %v231, %v433
    %v437 = vsel %vm349, 0, %v435
    %v438 = vcosq.f32.pop %v436
    %v439 = vsinq.f32.pop %v436
    %vm440 = vweird.f32 %v231
    %v441 = vadd.s32 %v437, 3
    %v442 = vand.u32 %v441, 3
    %vm443 = vcmp.lt.s32.totalorder %v442, 2
    %vm444 = vcmp.eq.s32.totalorder %v442, 0
    %v445 = vxor.u32 %v439, 2147483648
    %v446 = vsel %vm444, %v438, %v445
    %vm447 = vcmp.eq.s32.totalorder %v442, 2
    %v448 = vxor.u32 %v438, 2147483648
    %v449 = vsel %vm447, %v448, %v439
    %v450 = vsel %vm443, %v446, %v449
    %v451 = vsel %vm440, nan, %v450
    %v452 = vand.u32 2147483647, %v236
    %vm453 = vcmp.le.f32.partialorder %v452, 0.7853982
    %vm454 = vcmp.lt.s32.totalorder %v236, 0
    %v455 = vand.u32 %v236, 2139095040
    %v456 = vshrl.u32 %v455, 23
    %v457 = vsub.s32 %v456, 127
    %v458 = vand.u32 2147483647, %v236
    %v459 = vand.u32 %v458, 8388607
    %v460 = vor.u32 %v459, 8388608
    %v461 = vsub.s32 0, %v460
    %v462 = vadd.s32 %v457, 1
    %vm463 = vcmp.gt.s32.totalorder %v462, 0
    %v464 = vsel %vm463, %v462, 0
    %v465 = vshrl.u32 %v464, 5
    %v466 = vand.u32 %v464, 31
    %v467 = vsub.s32 32, %v466
    %v468 = vshrl.u32 683565275, %v467
    %v469 = vshll.u32 683565275, %v466
    %v470 = vshrl.u32 2475754826, %v467
    %v471 = vor.u32 %v469, %v470
    %v472 = vshll.u32 2475754826, %v466
    %v473 = vshrl.u32 2131351028, %v467
    %v474 = vor.u32 %v472, %v473
    %v475 = vshll.u32 2131351028, %v466
    %v476 = vshrl.u32 2102212464, %v467
    %v477 = vor.u32 %v475, %v476
    %v478 = vshll.u32 2102212464, %v466
    %v479 = vshrl.u32 920167782, %v467
    %v480 = vor.u32 %v478, %v479
    %v481 = vshll.u32 920167782, %v466
    %v482 = vshrl.u32 1326507024, %v467
    %v483 = vor.u32 %v481, %v482
    %vm484 = vcmp.lt.s32.totalorder %v465, 1
    %vm485 = vcmp.lt.s32.totalorder %v465, 2
    %vm486 = vcmp.lt.s32.totalorder %v465, 3
    %vm487 = vcmp.lt.s32.totalorder %v465, 4
    %v488 = vsel %vm484, %v468, %v471
    %v489 = vsel %vm487, %v477, 2102212464
    %v490 = vsel %vm486, %v474, %v489
    %v491 = vsel %vm485, %v488, %v490
    %v492 = vsel %vm484, %v471, %v474
    %v493 = vsel %vm487, %v480, 920167782
    %v494 = vsel %vm486, %v477, %v493
    %v495 = vsel %vm485, %v492, %v494
    %v496 = vsel %vm484, %v474, %v477
    %v497 = vsel %vm487, %v483, 1326507024
    %v498 = vsel %vm486, %v480, %v497
    %v499 = vsel %vm485, %v496, %v498
    %v500 = vshll.u32 %v460, 8
    %v501 = vmul.u32.u64.compose %v500, %v499
    %v502 = vextract.low.u32 %v501
    %v503 = vextract.high.u32 %v501
    %v504 = vmul.u32.u64.compose %v500, %v495
    %v505 = vextract.low.u32 %v504
    %v506 = vextract.high.u32 %v504
    %v507 = vmul.u32 %v500, %v491
    %v508 = vadd.s32 %v503, %v505
    %vm509 = vc.u32 %v503, %v505
    %v510 = vadd.s32 %v506, 1
    %v511 = vsel %vm509, %v510, %v506
    %v512 = vadd.s32 %v507, %v511
    %v513 = vadd.s32 %v512, 536870912
    %v514 = vshrl.u32 %v513, 30
    %v515 = vshll.u32 %v514, 30
    %v516 = vsub.s32 %v512, %v515
    %vm517 = vcmp.lt.s32.totalorder %v516, 0
    %v518 = vsub.s32 0, %v516
    %v519 = vsel %vm517, %v518, %v516
    %v520 = vclz %v519
    %v521 = vsub.s32 %v520, 2
    %vm522 = vcmp.gt.s32.totalorder 0, %v521
    %v523 = vsel %vm522, 0, %v521
    %v524 = vsub.s32 32, %v523
    %v525 = vshll.u32 %v516, %v523
    %v526 = vshrl.u32 %v508, %v524
    %v527 = vor.u32 %v525, %v526
    %v528 = vsub.s32 4294967266, %v523
    %v529 = vadd.s32 %v528, 127
    %v530 = vshll.u32 %v529, 23
    %v531 = vor.u32 4788187, %v530
    %v532 = vand.u32 2147483647, %v531
    %v534 = vcvt.s32.f32 %v527
    %v535 = vmul.f32 %v534, %v532
    %v536 = vxor.u32 %v535, 2147483648
    %v537 = vsel %vm454, %v536, %v535
    %v538 = vsub.s32 4, %v514
    %v539 = vsel %vm454, %v538, %v514
    %v540 = vsel %vm453, %v236, %v537
    %v541 = vsel %vm453, 0, %v539
    %v542 = vcosq.f32.pop %v540
    %v543 = vsinq.f32.pop %v540
    %vm544 = vweird.f32 %v236
    %v545 = vadd.s32 %v541, 3
    %v546 = vand.u32 %v545, 3
    %vm547 = vcmp.lt.s32.totalorder %v546, 2
    %vm548 = vcmp.eq.s32.totalorder %v546, 0
    %v549 = vxor.u32 %v543, 2147483648
    %v550 = vsel %vm548, %v542, %v549
    %vm551 = vcmp.eq.s32.totalorder %v546, 2
    %v552 = vxor.u32 %v542, 2147483648
    %v553 = vsel %vm551, %v552, %v543
    %v554 = vsel %vm547, %v550, %v553
    %v555 = vsel %vm544, nan, %v554
    %v556 = vand.u32 2147483647, %v241
    %vm557 = vcmp.le.f32.partialorder %v556, 0.7853982
    %vm558 = vcmp.lt.s32.totalorder %v241, 0
    %v559 = vand.u32 %v241, 2139095040
    %v560 = vshrl.u32 %v559, 23
    %v561 = vsub.s32 %v560, 127
    %v562 = vand.u32 2147483647, %v241
    %v563 = vand.u32 %v562, 8388607
    %v564 = vor.u32 %v563, 8388608
    %v565 = vsub.s32 0, %v564
    %v566 = vadd.s32 %v561, 1
    %vm567 = vcmp.gt.s32.totalorder %v566, 0
    %v568 = vsel %vm567, %v566, 0
    %v569 = vshrl.u32 %v568, 5
    %v570 = vand.u32 %v568, 31
    %v571 = vsub.s32 32, %v570
    %v572 = vshrl.u32 683565275, %v571
    %v573 = vshll.u32 683565275, %v570
    %v574 = vshrl.u32 2475754826, %v571
    %v575 = vor.u32 %v573, %v574
    %v576 = vshll.u32 2475754826, %v570
    %v577 = vshrl.u32 2131351028, %v571
    %v578 = vor.u32 %v576, %v577
    %v579 = vshll.u32 2131351028, %v570
    %v580 = vshrl.u32 2102212464, %v571
    %v581 = vor.u32 %v579, %v580
    %v582 = vshll.u32 2102212464, %v570
    %v583 = vshrl.u32 920167782, %v571
    %v584 = vor.u32 %v582, %v583
    %v585 = vshll.u32 920167782, %v570
    %v586 = vshrl.u32 1326507024, %v571
    %v587 = vor.u32 %v585, %v586
    %vm588 = vcmp.lt.s32.totalorder %v569, 1
    %vm589 = vcmp.lt.s32.totalorder %v569, 2
    %vm590 = vcmp.lt.s32.totalorder %v569, 3
    %vm591 = vcmp.lt.s32.totalorder %v569, 4
    %v592 = vsel %vm588, %v572, %v575
    %v593 = vsel %vm591, %v581, 2102212464
    %v594 = vsel %vm590, %v578, %v593
    %v595 = vsel %vm589, %v592, %v594
    %v596 = vsel %vm588, %v575, %v578
    %v597 = vsel %vm591, %v584, 920167782
    %v598 = vsel %vm590, %v581, %v597
    %v599 = vsel %vm589, %v596, %v598
    %v600 = vsel %vm588, %v578, %v581
    %v601 = vsel %vm591, %v587, 1326507024
    %v602 = vsel %vm590, %v584, %v601
    %v603 = vsel %vm589, %v600, %v602
    %v604 = vshll.u32 %v564, 8
    %v605 = vmul.u32.u64.compose %v604, %v603
    %v606 = vextract.low.u32 %v605
    %v607 = vextract.high.u32 %v605
    %v608 = vmul.u32.u64.compose %v604, %v599
    %v609 = vextract.low.u32 %v608
    %v610 = vextract.high.u32 %v608
    %v611 = vmul.u32 %v604, %v595
    %v612 = vadd.s32 %v607, %v609
    %vm613 = vc.u32 %v607, %v609
    %v614 = vadd.s32 %v610, 1
    %v615 = vsel %vm613, %v614, %v610
    %v616 = vadd.s32 %v611, %v615
    %v617 = vadd.s32 %v616, 536870912
    %v618 = vshrl.u32 %v617, 30
    %v619 = vshll.u32 %v618, 30
    %v620 = vsub.s32 %v616, %v619
    %vm621 = vcmp.lt.s32.totalorder %v620, 0
    %v622 = vsub.s32 0, %v620
    %v623 = vsel %vm621, %v622, %v620
    %v624 = vclz %v623
    %v625 = vsub.s32 %v624, 2
    %vm626 = vcmp.gt.s32.totalorder 0, %v625
    %v627 = vsel %vm626, 0, %v625
    %v628 = vsub.s32 32, %v627
    %v629 = vshll.u32 %v620, %v627
    %v630 = vshrl.u32 %v612, %v628
    %v631 = vor.u32 %v629, %v630
    %v632 = vsub.s32 4294967266, %v627
    %v633 = vadd.s32 %v632, 127
    %v634 = vshll.u32 %v633, 23
    %v635 = vor.u32 4788187, %v634
    %v636 = vand.u32 2147483647, %v635
    %v638 = vcvt.s32.f32 %v631
    %v639 = vmul.f32 %v638, %v636
    %v640 = vxor.u32 %v639, 2147483648
    %v641 = vsel %vm558, %v640, %v639
    %v642 = vsub.s32 4, %v618
    %v643 = vsel %vm558, %v642, %v618
    %v644 = vsel %vm557, %v241, %v641
    %v645 = vsel %vm557, 0, %v643
    %v646 = vcosq.f32.pop %v644
    %v647 = vsinq.f32.pop %v644
    %vm648 = vweird.f32 %v241
    %v649 = vadd.s32 %v645, 3
    %v650 = vand.u32 %v649, 3
    %vm651 = vcmp.lt.s32.totalorder %v650, 2
    %vm652 = vcmp.eq.s32.totalorder %v650, 0
    %v653 = vxor.u32 %v647, 2147483648
    %v654 = vsel %vm652, %v646, %v653
    %vm655 = vcmp.eq.s32.totalorder %v650, 2
    %v656 = vxor.u32 %v646, 2147483648
    %v657 = vsel %vm655, %v656, %v647
    %v658 = vsel %vm651, %v654, %v657
    %v659 = vsel %vm648, nan, %v658
    %s660 = scalar_lea.vmem %s3, 32
    %v661 = vld [vmem:[%s660] sm:$0xff]
    %v662 = vld [vmem:[%s660 + $0x8] sm:$0xff]
    %v663 = vld [vmem:[%s660 + $0x10] sm:$0xff]
    %v664 = vld [vmem:[%s660 + $0x18] sm:$0xff]
    %s665 = scalar_lea.vmem %s4, 32
    %v666 = vld [vmem:[%s665] sm:$0xff]
    %v667 = vld [vmem:[%s665 + $0x8] sm:$0xff]
    %v668 = vld [vmem:[%s665 + $0x10] sm:$0xff]
    %v669 = vld [vmem:[%s665 + $0x18] sm:$0xff]
    %671 = vset.pattern.permute.xlu0 0
    %672 = vperm.xlu0 %671, %v666
    %v673 = vpop.permute.xlu0 %672
    %676 = vset.pattern.permute.xlu0 0
    %677 = vperm.xlu0 %676, %v667
    %v678 = vpop.permute.xlu0 %677
    %681 = vset.pattern.permute.xlu0 0
    %682 = vperm.xlu0 %681, %v668
    %v683 = vpop.permute.xlu0 %682
    %686 = vset.pattern.permute.xlu0 0
    %687 = vperm.xlu0 %686, %v669
    %v688 = vpop.permute.xlu0 %687
    %v691 = vsel %vm146, %v661, 0
    %v694 = vsel %vm146, %v662, 0
    %v697 = vsel %vm146, %v663, 0
    %v700 = vsel %vm146, %v664, 0
    %702 = vmatprep.subr.mxu0 0.0
    %703 = vmatpush1.msra.mxu0 %v347
    %704 = vmatprep.subr.mxu0 0.0
    %705 = vmatpush1.msra.mxu0 %v451
    %706 = vmatprep.subr.mxu0 0.0
    %707 = vmatpush1.msra.mxu0 %v555
    %708 = vmatprep.subr.mxu0 0.0
    %709 = vmatpush1.msra.mxu0 %v659
    %710 = vmatprep.subr.mxu0 0.0
    %711 = vmatpush1.msra.mxu0 0.0
    %712 = vmatprep.subr.mxu0 0.0
    %713 = vmatpush1.msra.mxu0 0.0
    %714 = vmatprep.subr.mxu0 0.0
    %715 = vmatpush1.msra.mxu0 0.0
    %716 = vmatprep.subr.mxu0 0.0
    %717 = vmatpush1.msra.mxu0 0.0
    %718 = vmatprep.subr.mxu0 0.0
    %719 = vmatpush1.msra.mxu0 0.0
    %720 = vmatprep.subr.mxu0 0.0
    %721 = vmatpush1.msra.mxu0 0.0
    %722 = vmatprep.subr.mxu0 0.0
    %723 = vmatpush1.msra.mxu0 0.0
    %724 = vmatprep.subr.mxu0 0.0
    %725 = vmatpush1.msra.mxu0 0.0
    %726 = vmatprep.subr.mxu0 0.0
    %727 = vmatpush1.msra.mxu0 0.0
    %728 = vmatprep.subr.mxu0 0.0
    %729 = vmatpush1.msra.mxu0 0.0
    %730 = vmatprep.subr.mxu0 0.0
    %731 = vmatpush1.msra.mxu0 0.0
    %732 = vmatprep.subr.mxu0 0.0
    %733 = vmatpush1.msra.mxu0 0.0
    %734 = vmatprep.subr.mxu0 0.0
    %735 = vmatpush1.msra.mxu0 0.0
    %736 = vmatprep.subr.mxu0 0.0
    %737 = vmatpush1.msra.mxu0 0.0
    %738 = vmatprep.subr.mxu0 0.0
    %739 = vmatpush1.msra.mxu0 0.0
    %740 = vmatprep.subr.mxu0 0.0
    %741 = vmatpush1.msra.mxu0 0.0
    %742 = vmatprep.subr.mxu0 0.0
    %743 = vmatpush1.msra.mxu0 0.0
    %744 = vmatprep.subr.mxu0 0.0
    %745 = vmatpush1.msra.mxu0 0.0
    %746 = vmatprep.subr.mxu0 0.0
    %747 = vmatpush1.msra.mxu0 0.0
    %748 = vmatprep.subr.mxu0 0.0
    %749 = vmatpush1.msra.mxu0 0.0
    %750 = vmatprep.subr.mxu0 0.0
    %751 = vmatpush1.msra.mxu0 0.0
    %752 = vmatprep.subr.mxu0 0.0
    %753 = vmatpush1.msra.mxu0 0.0
    %754 = vmatprep.subr.mxu0 0.0
    %755 = vmatpush1.msra.mxu0 0.0
    %756 = vmatprep.subr.mxu0 0.0
    %757 = vmatpush1.msra.mxu0 0.0
    %758 = vmatprep.subr.mxu0 0.0
    %759 = vmatpush1.msra.mxu0 0.0
    %760 = vmatprep.subr.mxu0 0.0
    %761 = vmatpush1.msra.mxu0 0.0
    %762 = vmatprep.subr.mxu0 0.0
    %763 = vmatpush1.msra.mxu0 0.0
    %764 = vmatprep.subr.mxu0 0.0
    %765 = vmatpush1.msra.mxu0 0.0
    %766 = vmatprep.mubr.f32.mxu0 0.0
    %767 = vmatmul.mubr.f32.gmra.mrb[0].mxu0 %v691
    %v768 = vpop.f32.mrb[0].mxu0
    %v769 = vadd.f32 %v673, %v768
    %v770 = vpop.f32.mrb[0].mxu0
    %771 = vmatprep.mubr.f32.mxu0 0.0
    %772 = vmatmul.mubr.f32.gmra.mrb[0].mxu0 %v694
    %v773 = vpop.f32.mrb[0].mxu0
    %v774 = vadd.f32 %v678, %v773
    %v775 = vpop.f32.mrb[0].mxu0
    %776 = vmatprep.mubr.f32.mxu0 0.0
    %777 = vmatmul.mubr.f32.gmra.mrb[0].mxu0 %v697
    %v778 = vpop.f32.mrb[0].mxu0
    %v779 = vadd.f32 %v683, %v778
    %v780 = vpop.f32.mrb[0].mxu0
    %781 = vmatprep.mubr.f32.mxu0 0.0
    %782 = vmatmul.mubr.f32.gmra.mrb[0].mxu0 %v700
    %v783 = vpop.f32.mrb[0].mxu0
    %v784 = vadd.f32 %v688, %v783
    %v785 = vpop.f32.mrb[0].mxu0
    %786 = vdwg.mxu0
    %v787 = vand.u32 2147483647, %v769
    %vm788 = vcmp.le.f32.partialorder %v787, 0.7853982
    %vm789 = vcmp.lt.s32.totalorder %v769, 0
    %v790 = vand.u32 %v769, 2139095040
    %v791 = vshrl.u32 %v790, 23
    %v792 = vsub.s32 %v791, 127
    %v793 = vand.u32 2147483647, %v769
    %v794 = vand.u32 %v793, 8388607
    %v795 = vor.u32 %v794, 8388608
    %v796 = vsub.s32 0, %v795
    %v797 = vadd.s32 %v792, 1
    %vm798 = vcmp.gt.s32.totalorder %v797, 0
    %v799 = vsel %vm798, %v797, 0
    %v800 = vshrl.u32 %v799, 5
    %v801 = vand.u32 %v799, 31
    %v802 = vsub.s32 32, %v801
    %v803 = vshrl.u32 683565275, %v802
    %v804 = vshll.u32 683565275, %v801
    %v805 = vshrl.u32 2475754826, %v802
    %v806 = vor.u32 %v804, %v805
    %v807 = vshll.u32 2475754826, %v801
    %v808 = vshrl.u32 2131351028, %v802
    %v809 = vor.u32 %v807, %v808
    %v810 = vshll.u32 2131351028, %v801
    %v811 = vshrl.u32 2102212464, %v802
    %v812 = vor.u32 %v810, %v811
    %v813 = vshll.u32 2102212464, %v801
    %v814 = vshrl.u32 920167782, %v802
    %v815 = vor.u32 %v813, %v814
    %v816 = vshll.u32 920167782, %v801
    %v817 = vshrl.u32 1326507024, %v802
    %v818 = vor.u32 %v816, %v817
    %vm819 = vcmp.lt.s32.totalorder %v800, 1
    %vm820 = vcmp.lt.s32.totalorder %v800, 2
    %vm821 = vcmp.lt.s32.totalorder %v800, 3
    %vm822 = vcmp.lt.s32.totalorder %v800, 4
    %v823 = vsel %vm819, %v803, %v806
    %v824 = vsel %vm822, %v812, 2102212464
    %v825 = vsel %vm821, %v809, %v824
    %v826 = vsel %vm820, %v823, %v825
    %v827 = vsel %vm819, %v806, %v809
    %v828 = vsel %vm822, %v815, 920167782
    %v829 = vsel %vm821, %v812, %v828
    %v830 = vsel %vm820, %v827, %v829
    %v831 = vsel %vm819, %v809, %v812
    %v832 = vsel %vm822, %v818, 1326507024
    %v833 = vsel %vm821, %v815, %v832
    %v834 = vsel %vm820, %v831, %v833
    %v835 = vshll.u32 %v795, 8
    %v836 = vmul.u32.u64.compose %v835, %v834
    %v837 = vextract.low.u32 %v836
    %v838 = vextract.high.u32 %v836
    %v839 = vmul.u32.u64.compose %v835, %v830
    %v840 = vextract.low.u32 %v839
    %v841 = vextract.high.u32 %v839
    %v842 = vmul.u32 %v835, %v826
    %v843 = vadd.s32 %v838, %v840
    %vm844 = vc.u32 %v838, %v840
    %v845 = vadd.s32 %v841, 1
    %v846 = vsel %vm844, %v845, %v841
    %v847 = vadd.s32 %v842, %v846
    %v848 = vadd.s32 %v847, 536870912
    %v849 = vshrl.u32 %v848, 30
    %v850 = vshll.u32 %v849, 30
    %v851 = vsub.s32 %v847, %v850
    %vm852 = vcmp.lt.s32.totalorder %v851, 0
    %v853 = vsub.s32 0, %v851
    %v854 = vsel %vm852, %v853, %v851
    %v855 = vclz %v854
    %v856 = vsub.s32 %v855, 2
    %vm857 = vcmp.gt.s32.totalorder 0, %v856
    %v858 = vsel %vm857, 0, %v856
    %v859 = vsub.s32 32, %v858
    %v860 = vshll.u32 %v851, %v858
    %v861 = vshrl.u32 %v843, %v859
    %v862 = vor.u32 %v860, %v861
    %v863 = vsub.s32 4294967266, %v858
    %v864 = vadd.s32 %v863, 127
    %v865 = vshll.u32 %v864, 23
    %v866 = vor.u32 4788187, %v865
    %v867 = vand.u32 2147483647, %v866
    %v869 = vcvt.s32.f32 %v862
    %v870 = vmul.f32 %v869, %v867
    %v871 = vxor.u32 %v870, 2147483648
    %v872 = vsel %vm789, %v871, %v870
    %v873 = vsub.s32 4, %v849
    %v874 = vsel %vm789, %v873, %v849
    %v875 = vsel %vm788, %v769, %v872
    %v876 = vsel %vm788, 0, %v874
    %v877 = vcosq.f32.pop %v875
    %v878 = vsinq.f32.pop %v875
    %vm879 = vweird.f32 %v769
    %v880 = vadd.s32 %v876, 3
    %v881 = vand.u32 %v880, 3
    %vm882 = vcmp.lt.s32.totalorder %v881, 2
    %vm883 = vcmp.eq.s32.totalorder %v881, 0
    %v884 = vxor.u32 %v878, 2147483648
    %v885 = vsel %vm883, %v877, %v884
    %vm886 = vcmp.eq.s32.totalorder %v881, 2
    %v887 = vxor.u32 %v877, 2147483648
    %v888 = vsel %vm886, %v887, %v878
    %v889 = vsel %vm882, %v885, %v888
    %v890 = vsel %vm879, nan, %v889
    %v891 = vand.u32 2147483647, %v774
    %vm892 = vcmp.le.f32.partialorder %v891, 0.7853982
    %vm893 = vcmp.lt.s32.totalorder %v774, 0
    %v894 = vand.u32 %v774, 2139095040
    %v895 = vshrl.u32 %v894, 23
    %v896 = vsub.s32 %v895, 127
    %v897 = vand.u32 2147483647, %v774
    %v898 = vand.u32 %v897, 8388607
    %v899 = vor.u32 %v898, 8388608
    %v900 = vsub.s32 0, %v899
    %v901 = vadd.s32 %v896, 1
    %vm902 = vcmp.gt.s32.totalorder %v901, 0
    %v903 = vsel %vm902, %v901, 0
    %v904 = vshrl.u32 %v903, 5
    %v905 = vand.u32 %v903, 31
    %v906 = vsub.s32 32, %v905
    %v907 = vshrl.u32 683565275, %v906
    %v908 = vshll.u32 683565275, %v905
    %v909 = vshrl.u32 2475754826, %v906
    %v910 = vor.u32 %v908, %v909
    %v911 = vshll.u32 2475754826, %v905
    %v912 = vshrl.u32 2131351028, %v906
    %v913 = vor.u32 %v911, %v912
    %v914 = vshll.u32 2131351028, %v905
    %v915 = vshrl.u32 2102212464, %v906
    %v916 = vor.u32 %v914, %v915
    %v917 = vshll.u32 2102212464, %v905
    %v918 = vshrl.u32 920167782, %v906
    %v919 = vor.u32 %v917, %v918
    %v920 = vshll.u32 920167782, %v905
    %v921 = vshrl.u32 1326507024, %v906
    %v922 = vor.u32 %v920, %v921
    %vm923 = vcmp.lt.s32.totalorder %v904, 1
    %vm924 = vcmp.lt.s32.totalorder %v904, 2
    %vm925 = vcmp.lt.s32.totalorder %v904, 3
    %vm926 = vcmp.lt.s32.totalorder %v904, 4
    %v927 = vsel %vm923, %v907, %v910
    %v928 = vsel %vm926, %v916, 2102212464
    %v929 = vsel %vm925, %v913, %v928
    %v930 = vsel %vm924, %v927, %v929
    %v931 = vsel %vm923, %v910, %v913
    %v932 = vsel %vm926, %v919, 920167782
    %v933 = vsel %vm925, %v916, %v932
    %v934 = vsel %vm924, %v931, %v933
    %v935 = vsel %vm923, %v913, %v916
    %v936 = vsel %vm926, %v922, 1326507024
    %v937 = vsel %vm925, %v919, %v936
    %v938 = vsel %vm924, %v935, %v937
    %v939 = vshll.u32 %v899, 8
    %v940 = vmul.u32.u64.compose %v939, %v938
    %v941 = vextract.low.u32 %v940
    %v942 = vextract.high.u32 %v940
    %v943 = vmul.u32.u64.compose %v939, %v934
    %v944 = vextract.low.u32 %v943
    %v945 = vextract.high.u32 %v943
    %v946 = vmul.u32 %v939, %v930
    %v947 = vadd.s32 %v942, %v944
    %vm948 = vc.u32 %v942, %v944
    %v949 = vadd.s32 %v945, 1
    %v950 = vsel %vm948, %v949, %v945
    %v951 = vadd.s32 %v946, %v950
    %v952 = vadd.s32 %v951, 536870912
    %v953 = vshrl.u32 %v952, 30
    %v954 = vshll.u32 %v953, 30
    %v955 = vsub.s32 %v951, %v954
    %vm956 = vcmp.lt.s32.totalorder %v955, 0
    %v957 = vsub.s32 0, %v955
    %v958 = vsel %vm956, %v957, %v955
    %v959 = vclz %v958
    %v960 = vsub.s32 %v959, 2
    %vm961 = vcmp.gt.s32.totalorder 0, %v960
    %v962 = vsel %vm961, 0, %v960
    %v963 = vsub.s32 32, %v962
    %v964 = vshll.u32 %v955, %v962
    %v965 = vshrl.u32 %v947, %v963
    %v966 = vor.u32 %v964, %v965
    %v967 = vsub.s32 4294967266, %v962
    %v968 = vadd.s32 %v967, 127
    %v969 = vshll.u32 %v968, 23
    %v970 = vor.u32 4788187, %v969
    %v971 = vand.u32 2147483647, %v970
    %v973 = vcvt.s32.f32 %v966
    %v974 = vmul.f32 %v973, %v971
    %v975 = vxor.u32 %v974, 2147483648
    %v976 = vsel %vm893, %v975, %v974
    %v977 = vsub.s32 4, %v953
    %v978 = vsel %vm893, %v977, %v953
    %v979 = vsel %vm892, %v774, %v976
    %v980 = vsel %vm892, 0, %v978
    %v981 = vcosq.f32.pop %v979
    %v982 = vsinq.f32.pop %v979
    %vm983 = vweird.f32 %v774
    %v984 = vadd.s32 %v980, 3
    %v985 = vand.u32 %v984, 3
    %vm986 = vcmp.lt.s32.totalorder %v985, 2
    %vm987 = vcmp.eq.s32.totalorder %v985, 0
    %v988 = vxor.u32 %v982, 2147483648
    %v989 = vsel %vm987, %v981, %v988
    %vm990 = vcmp.eq.s32.totalorder %v985, 2
    %v991 = vxor.u32 %v981, 2147483648
    %v992 = vsel %vm990, %v991, %v982
    %v993 = vsel %vm986, %v989, %v992
    %v994 = vsel %vm983, nan, %v993
    %v995 = vand.u32 2147483647, %v779
    %vm996 = vcmp.le.f32.partialorder %v995, 0.7853982
    %vm997 = vcmp.lt.s32.totalorder %v779, 0
    %v998 = vand.u32 %v779, 2139095040
    %v999 = vshrl.u32 %v998, 23
    %v1000 = vsub.s32 %v999, 127
    %v1001 = vand.u32 2147483647, %v779
    %v1002 = vand.u32 %v1001, 8388607
    %v1003 = vor.u32 %v1002, 8388608
    %v1004 = vsub.s32 0, %v1003
    %v1005 = vadd.s32 %v1000, 1
    %vm1006 = vcmp.gt.s32.totalorder %v1005, 0
    %v1007 = vsel %vm1006, %v1005, 0
    %v1008 = vshrl.u32 %v1007, 5
    %v1009 = vand.u32 %v1007, 31
    %v1010 = vsub.s32 32, %v1009
    %v1011 = vshrl.u32 683565275, %v1010
    %v1012 = vshll.u32 683565275, %v1009
    %v1013 = vshrl.u32 2475754826, %v1010
    %v1014 = vor.u32 %v1012, %v1013
    %v1015 = vshll.u32 2475754826, %v1009
    %v1016 = vshrl.u32 2131351028, %v1010
    %v1017 = vor.u32 %v1015, %v1016
    %v1018 = vshll.u32 2131351028, %v1009
    %v1019 = vshrl.u32 2102212464, %v1010
    %v1020 = vor.u32 %v1018, %v1019
    %v1021 = vshll.u32 2102212464, %v1009
    %v1022 = vshrl.u32 920167782, %v1010
    %v1023 = vor.u32 %v1021, %v1022
    %v1024 = vshll.u32 920167782, %v1009
    %v1025 = vshrl.u32 1326507024, %v1010
    %v1026 = vor.u32 %v1024, %v1025
    %vm1027 = vcmp.lt.s32.totalorder %v1008, 1
    %vm1028 = vcmp.lt.s32.totalorder %v1008, 2
    %vm1029 = vcmp.lt.s32.totalorder %v1008, 3
    %vm1030 = vcmp.lt.s32.totalorder %v1008, 4
    %v1031 = vsel %vm1027, %v1011, %v1014
    %v1032 = vsel %vm1030, %v1020, 2102212464
    %v1033 = vsel %vm1029, %v1017, %v1032
    %v1034 = vsel %vm1028, %v1031, %v1033
    %v1035 = vsel %vm1027, %v1014, %v1017
    %v1036 = vsel %vm1030, %v1023, 920167782
    %v1037 = vsel %vm1029, %v1020, %v1036
    %v1038 = vsel %vm1028, %v1035, %v1037
    %v1039 = vsel %vm1027, %v1017, %v1020
    %v1040 = vsel %vm1030, %v1026, 1326507024
    %v1041 = vsel %vm1029, %v1023, %v1040
    %v1042 = vsel %vm1028, %v1039, %v1041
    %v1043 = vshll.u32 %v1003, 8
    %v1044 = vmul.u32.u64.compose %v1043, %v1042
    %v1045 = vextract.low.u32 %v1044
    %v1046 = vextract.high.u32 %v1044
    %v1047 = vmul.u32.u64.compose %v1043, %v1038
    %v1048 = vextract.low.u32 %v1047
    %v1049 = vextract.high.u32 %v1047
    %v1050 = vmul.u32 %v1043, %v1034
    %v1051 = vadd.s32 %v1046, %v1048
    %vm1052 = vc.u32 %v1046, %v1048
    %v1053 = vadd.s32 %v1049, 1
    %v1054 = vsel %vm1052, %v1053, %v1049
    %v1055 = vadd.s32 %v1050, %v1054
    %v1056 = vadd.s32 %v1055, 536870912
    %v1057 = vshrl.u32 %v1056, 30
    %v1058 = vshll.u32 %v1057, 30
    %v1059 = vsub.s32 %v1055, %v1058
    %vm1060 = vcmp.lt.s32.totalorder %v1059, 0
    %v1061 = vsub.s32 0, %v1059
    %v1062 = vsel %vm1060, %v1061, %v1059
    %v1063 = vclz %v1062
    %v1064 = vsub.s32 %v1063, 2
    %vm1065 = vcmp.gt.s32.totalorder 0, %v1064
    %v1066 = vsel %vm1065, 0, %v1064
    %v1067 = vsub.s32 32, %v1066
    %v1068 = vshll.u32 %v1059, %v1066
    %v1069 = vshrl.u32 %v1051, %v1067
    %v1070 = vor.u32 %v1068, %v1069
    %v1071 = vsub.s32 4294967266, %v1066
    %v1072 = vadd.s32 %v1071, 127
    %v1073 = vshll.u32 %v1072, 23
    %v1074 = vor.u32 4788187, %v1073
    %v1075 = vand.u32 2147483647, %v1074
    %v1077 = vcvt.s32.f32 %v1070
    %v1078 = vmul.f32 %v1077, %v1075
    %v1079 = vxor.u32 %v1078, 2147483648
    %v1080 = vsel %vm997, %v1079, %v1078
    %v1081 = vsub.s32 4, %v1057
    %v1082 = vsel %vm997, %v1081, %v1057
    %v1083 = vsel %vm996, %v779, %v1080
    %v1084 = vsel %vm996, 0, %v1082
    %v1085 = vcosq.f32.pop %v1083
    %v1086 = vsinq.f32.pop %v1083
    %vm1087 = vweird.f32 %v779
    %v1088 = vadd.s32 %v1084, 3
    %v1089 = vand.u32 %v1088, 3
    %vm1090 = vcmp.lt.s32.totalorder %v1089, 2
    %vm1091 = vcmp.eq.s32.totalorder %v1089, 0
    %v1092 = vxor.u32 %v1086, 2147483648
    %v1093 = vsel %vm1091, %v1085, %v1092
    %vm1094 = vcmp.eq.s32.totalorder %v1089, 2
    %v1095 = vxor.u32 %v1085, 2147483648
    %v1096 = vsel %vm1094, %v1095, %v1086
    %v1097 = vsel %vm1090, %v1093, %v1096
    %v1098 = vsel %vm1087, nan, %v1097
    %v1099 = vand.u32 2147483647, %v784
    %vm1100 = vcmp.le.f32.partialorder %v1099, 0.7853982
    %vm1101 = vcmp.lt.s32.totalorder %v784, 0
    %v1102 = vand.u32 %v784, 2139095040
    %v1103 = vshrl.u32 %v1102, 23
    %v1104 = vsub.s32 %v1103, 127
    %v1105 = vand.u32 2147483647, %v784
    %v1106 = vand.u32 %v1105, 8388607
    %v1107 = vor.u32 %v1106, 8388608
    %v1108 = vsub.s32 0, %v1107
    %v1109 = vadd.s32 %v1104, 1
    %vm1110 = vcmp.gt.s32.totalorder %v1109, 0
    %v1111 = vsel %vm1110, %v1109, 0
    %v1112 = vshrl.u32 %v1111, 5
    %v1113 = vand.u32 %v1111, 31
    %v1114 = vsub.s32 32, %v1113
    %v1115 = vshrl.u32 683565275, %v1114
    %v1116 = vshll.u32 683565275, %v1113
    %v1117 = vshrl.u32 2475754826, %v1114
    %v1118 = vor.u32 %v1116, %v1117
    %v1119 = vshll.u32 2475754826, %v1113
    %v1120 = vshrl.u32 2131351028, %v1114
    %v1121 = vor.u32 %v1119, %v1120
    %v1122 = vshll.u32 2131351028, %v1113
    %v1123 = vshrl.u32 2102212464, %v1114
    %v1124 = vor.u32 %v1122, %v1123
    %v1125 = vshll.u32 2102212464, %v1113
    %v1126 = vshrl.u32 920167782, %v1114
    %v1127 = vor.u32 %v1125, %v1126
    %v1128 = vshll.u32 920167782, %v1113
    %v1129 = vshrl.u32 1326507024, %v1114
    %v1130 = vor.u32 %v1128, %v1129
    %vm1131 = vcmp.lt.s32.totalorder %v1112, 1
    %vm1132 = vcmp.lt.s32.totalorder %v1112, 2
    %vm1133 = vcmp.lt.s32.totalorder %v1112, 3
    %vm1134 = vcmp.lt.s32.totalorder %v1112, 4
    %v1135 = vsel %vm1131, %v1115, %v1118
    %v1136 = vsel %vm1134, %v1124, 2102212464
    %v1137 = vsel %vm1133, %v1121, %v1136
    %v1138 = vsel %vm1132, %v1135, %v1137
    %v1139 = vsel %vm1131, %v1118, %v1121
    %v1140 = vsel %vm1134, %v1127, 920167782
    %v1141 = vsel %vm1133, %v1124, %v1140
    %v1142 = vsel %vm1132, %v1139, %v1141
    %v1143 = vsel %vm1131, %v1121, %v1124
    %v1144 = vsel %vm1134, %v1130, 1326507024
    %v1145 = vsel %vm1133, %v1127, %v1144
    %v1146 = vsel %vm1132, %v1143, %v1145
    %v1147 = vshll.u32 %v1107, 8
    %v1148 = vmul.u32.u64.compose %v1147, %v1146
    %v1149 = vextract.low.u32 %v1148
    %v1150 = vextract.high.u32 %v1148
    %v1151 = vmul.u32.u64.compose %v1147, %v1142
    %v1152 = vextract.low.u32 %v1151
    %v1153 = vextract.high.u32 %v1151
    %v1154 = vmul.u32 %v1147, %v1138
    %v1155 = vadd.s32 %v1150, %v1152
    %vm1156 = vc.u32 %v1150, %v1152
    %v1157 = vadd.s32 %v1153, 1
    %v1158 = vsel %vm1156, %v1157, %v1153
    %v1159 = vadd.s32 %v1154, %v1158
    %v1160 = vadd.s32 %v1159, 536870912
    %v1161 = vshrl.u32 %v1160, 30
    %v1162 = vshll.u32 %v1161, 30
    %v1163 = vsub.s32 %v1159, %v1162
    %vm1164 = vcmp.lt.s32.totalorder %v1163, 0
    %v1165 = vsub.s32 0, %v1163
    %v1166 = vsel %vm1164, %v1165, %v1163
    %v1167 = vclz %v1166
    %v1168 = vsub.s32 %v1167, 2
    %vm1169 = vcmp.gt.s32.totalorder 0, %v1168
    %v1170 = vsel %vm1169, 0, %v1168
    %v1171 = vsub.s32 32, %v1170
    %v1172 = vshll.u32 %v1163, %v1170
    %v1173 = vshrl.u32 %v1155, %v1171
    %v1174 = vor.u32 %v1172, %v1173
    %v1175 = vsub.s32 4294967266, %v1170
    %v1176 = vadd.s32 %v1175, 127
    %v1177 = vshll.u32 %v1176, 23
    %v1178 = vor.u32 4788187, %v1177
    %v1179 = vand.u32 2147483647, %v1178
    %v1181 = vcvt.s32.f32 %v1174
    %v1182 = vmul.f32 %v1181, %v1179
    %v1183 = vxor.u32 %v1182, 2147483648
    %v1184 = vsel %vm1101, %v1183, %v1182
    %v1185 = vsub.s32 4, %v1161
    %v1186 = vsel %vm1101, %v1185, %v1161
    %v1187 = vsel %vm1100, %v784, %v1184
    %v1188 = vsel %vm1100, 0, %v1186
    %v1189 = vcosq.f32.pop %v1187
    %v1190 = vsinq.f32.pop %v1187
    %vm1191 = vweird.f32 %v784
    %v1192 = vadd.s32 %v1188, 3
    %v1193 = vand.u32 %v1192, 3
    %vm1194 = vcmp.lt.s32.totalorder %v1193, 2
    %vm1195 = vcmp.eq.s32.totalorder %v1193, 0
    %v1196 = vxor.u32 %v1190, 2147483648
    %v1197 = vsel %vm1195, %v1189, %v1196
    %vm1198 = vcmp.eq.s32.totalorder %v1193, 2
    %v1199 = vxor.u32 %v1189, 2147483648
    %v1200 = vsel %vm1198, %v1199, %v1190
    %v1201 = vsel %vm1194, %v1197, %v1200
    %v1202 = vsel %vm1191, nan, %v1201
    %s1203 = scalar_lea.vmem %s3, 64
    %v1204 = vld [vmem:[%s1203] sm:$0xff]
    %v1205 = vld [vmem:[%s1203 + $0x8] sm:$0xff]
    %v1206 = vld [vmem:[%s1203 + $0x10] sm:$0xff]
    %v1207 = vld [vmem:[%s1203 + $0x18] sm:$0xff]
    %s1208 = scalar_lea.vmem %s4, 64
    %v1209 = vld [vmem:[%s1208] sm:$0xff]
    %v1210 = vld [vmem:[%s1208 + $0x8] sm:$0xff]
    %v1211 = vld [vmem:[%s1208 + $0x10] sm:$0xff]
    %v1212 = vld [vmem:[%s1208 + $0x18] sm:$0xff]
    %1214 = vset.pattern.permute.xlu0 0
    %1215 = vperm.xlu0 %1214, %v1209
    %v1216 = vpop.permute.xlu0 %1215
    %1219 = vset.pattern.permute.xlu0 0
    %1220 = vperm.xlu0 %1219, %v1210
    %v1221 = vpop.permute.xlu0 %1220
    %1224 = vset.pattern.permute.xlu0 0
    %1225 = vperm.xlu0 %1224, %v1211
    %v1226 = vpop.permute.xlu0 %1225
    %1229 = vset.pattern.permute.xlu0 0
    %1230 = vperm.xlu0 %1229, %v1212
    %v1231 = vpop.permute.xlu0 %1230
    %v1234 = vsel %vm146, %v1204, 0
    %v1237 = vsel %vm146, %v1205, 0
    %v1240 = vsel %vm146, %v1206, 0
    %v1243 = vsel %vm146, %v1207, 0
    %1245 = vmatprep.subr.mxu0 0.0
    %1246 = vmatpush1.msra.mxu0 %v890
    %1247 = vmatprep.subr.mxu0 0.0
    %1248 = vmatpush1.msra.mxu0 %v994
    %1249 = vmatprep.subr.mxu0 0.0
    %1250 = vmatpush1.msra.mxu0 %v1098
    %1251 = vmatprep.subr.mxu0 0.0
    %1252 = vmatpush1.msra.mxu0 %v1202
    %1253 = vmatprep.subr.mxu0 0.0
    %1254 = vmatpush1.msra.mxu0 0.0
    %1255 = vmatprep.subr.mxu0 0.0
    %1256 = vmatpush1.msra.mxu0 0.0
    %1257 = vmatprep.subr.mxu0 0.0
    %1258 = vmatpush1.msra.mxu0 0.0
    %1259 = vmatprep.subr.mxu0 0.0
    %1260 = vmatpush1.msra.mxu0 0.0
    %1261 = vmatprep.subr.mxu0 0.0
    %1262 = vmatpush1.msra.mxu0 0.0
    %1263 = vmatprep.subr.mxu0 0.0
    %1264 = vmatpush1.msra.mxu0 0.0
    %1265 = vmatprep.subr.mxu0 0.0
    %1266 = vmatpush1.msra.mxu0 0.0
    %1267 = vmatprep.subr.mxu0 0.0
    %1268 = vmatpush1.msra.mxu0 0.0
    %1269 = vmatprep.subr.mxu0 0.0
    %1270 = vmatpush1.msra.mxu0 0.0
    %1271 = vmatprep.subr.mxu0 0.0
    %1272 = vmatpush1.msra.mxu0 0.0
    %1273 = vmatprep.subr.mxu0 0.0
    %1274 = vmatpush1.msra.mxu0 0.0
    %1275 = vmatprep.subr.mxu0 0.0
    %1276 = vmatpush1.msra.mxu0 0.0
    %1277 = vmatprep.subr.mxu0 0.0
    %1278 = vmatpush1.msra.mxu0 0.0
    %1279 = vmatprep.subr.mxu0 0.0
    %1280 = vmatpush1.msra.mxu0 0.0
    %1281 = vmatprep.subr.mxu0 0.0
    %1282 = vmatpush1.msra.mxu0 0.0
    %1283 = vmatprep.subr.mxu0 0.0
    %1284 = vmatpush1.msra.mxu0 0.0
    %1285 = vmatprep.subr.mxu0 0.0
    %1286 = vmatpush1.msra.mxu0 0.0
    %1287 = vmatprep.subr.mxu0 0.0
    %1288 = vmatpush1.msra.mxu0 0.0
    %1289 = vmatprep.subr.mxu0 0.0
    %1290 = vmatpush1.msra.mxu0 0.0
    %1291 = vmatprep.subr.mxu0 0.0
    %1292 = vmatpush1.msra.mxu0 0.0
    %1293 = vmatprep.subr.mxu0 0.0
    %1294 = vmatpush1.msra.mxu0 0.0
    %1295 = vmatprep.subr.mxu0 0.0
    %1296 = vmatpush1.msra.mxu0 0.0
    %1297 = vmatprep.subr.mxu0 0.0
    %1298 = vmatpush1.msra.mxu0 0.0
    %1299 = vmatprep.subr.mxu0 0.0
    %1300 = vmatpush1.msra.mxu0 0.0
    %1301 = vmatprep.subr.mxu0 0.0
    %1302 = vmatpush1.msra.mxu0 0.0
    %1303 = vmatprep.subr.mxu0 0.0
    %1304 = vmatpush1.msra.mxu0 0.0
    %1305 = vmatprep.subr.mxu0 0.0
    %1306 = vmatpush1.msra.mxu0 0.0
    %1307 = vmatprep.subr.mxu0 0.0
    %1308 = vmatpush1.msra.mxu0 0.0
    %1309 = vmatprep.mubr.f32.mxu0 0.0
    %1310 = vmatmul.mubr.f32.gmra.mrb[0].mxu0 %v1234
    %v1311 = vpop.f32.mrb[0].mxu0
    %v1312 = vadd.f32 %v1216, %v1311
    %v1313 = vpop.f32.mrb[0].mxu0
    %1314 = vmatprep.mubr.f32.mxu0 0.0
    %1315 = vmatmul.mubr.f32.gmra.mrb[0].mxu0 %v1237
    %v1316 = vpop.f32.mrb[0].mxu0
    %v1317 = vadd.f32 %v1221, %v1316
    %v1318 = vpop.f32.mrb[0].mxu0
    %1319 = vmatprep.mubr.f32.mxu0 0.0
    %1320 = vmatmul.mubr.f32.gmra.mrb[0].mxu0 %v1240
    %v1321 = vpop.f32.mrb[0].mxu0
    %v1322 = vadd.f32 %v1226, %v1321
    %v1323 = vpop.f32.mrb[0].mxu0
    %1324 = vmatprep.mubr.f32.mxu0 0.0
    %1325 = vmatmul.mubr.f32.gmra.mrb[0].mxu0 %v1243
    %v1326 = vpop.f32.mrb[0].mxu0
    %v1327 = vadd.f32 %v1231, %v1326
    %v1328 = vpop.f32.mrb[0].mxu0
    %1329 = vdwg.mxu0
    %v1330 = vand.u32 2147483647, %v1312
    %vm1331 = vcmp.le.f32.partialorder %v1330, 0.7853982
    %vm1332 = vcmp.lt.s32.totalorder %v1312, 0
    %v1333 = vand.u32 %v1312, 2139095040
    %v1334 = vshrl.u32 %v1333, 23
    %v1335 = vsub.s32 %v1334, 127
    %v1336 = vand.u32 2147483647, %v1312
    %v1337 = vand.u32 %v1336, 8388607
    %v1338 = vor.u32 %v1337, 8388608
    %v1339 = vsub.s32 0, %v1338
    %v1340 = vadd.s32 %v1335, 1
    %vm1341 = vcmp.gt.s32.totalorder %v1340, 0
    %v1342 = vsel %vm1341, %v1340, 0
    %v1343 = vshrl.u32 %v1342, 5
    %v1344 = vand.u32 %v1342, 31
    %v1345 = vsub.s32 32, %v1344
    %v1346 = vshrl.u32 683565275, %v1345
    %v1347 = vshll.u32 683565275, %v1344
    %v1348 = vshrl.u32 2475754826, %v1345
    %v1349 = vor.u32 %v1347, %v1348
    %v1350 = vshll.u32 2475754826, %v1344
    %v1351 = vshrl.u32 2131351028, %v1345
    %v1352 = vor.u32 %v1350, %v1351
    %v1353 = vshll.u32 2131351028, %v1344
    %v1354 = vshrl.u32 2102212464, %v1345
    %v1355 = vor.u32 %v1353, %v1354
    %v1356 = vshll.u32 2102212464, %v1344
    %v1357 = vshrl.u32 920167782, %v1345
    %v1358 = vor.u32 %v1356, %v1357
    %v1359 = vshll.u32 920167782, %v1344
    %v1360 = vshrl.u32 1326507024, %v1345
    %v1361 = vor.u32 %v1359, %v1360
    %vm1362 = vcmp.lt.s32.totalorder %v1343, 1
    %vm1363 = vcmp.lt.s32.totalorder %v1343, 2
    %vm1364 = vcmp.lt.s32.totalorder %v1343, 3
    %vm1365 = vcmp.lt.s32.totalorder %v1343, 4
    %v1366 = vsel %vm1362, %v1346, %v1349
    %v1367 = vsel %vm1365, %v1355, 2102212464
    %v1368 = vsel %vm1364, %v1352, %v1367
    %v1369 = vsel %vm1363, %v1366, %v1368
    %v1370 = vsel %vm1362, %v1349, %v1352
    %v1371 = vsel %vm1365, %v1358, 920167782
    %v1372 = vsel %vm1364, %v1355, %v1371
    %v1373 = vsel %vm1363, %v1370, %v1372
    %v1374 = vsel %vm1362, %v1352, %v1355
    %v1375 = vsel %vm1365, %v1361, 1326507024
    %v1376 = vsel %vm1364, %v1358, %v1375
    %v1377 = vsel %vm1363, %v1374, %v1376
    %v1378 = vshll.u32 %v1338, 8
    %v1379 = vmul.u32.u64.compose %v1378, %v1377
    %v1380 = vextract.low.u32 %v1379
    %v1381 = vextract.high.u32 %v1379
    %v1382 = vmul.u32.u64.compose %v1378, %v1373
    %v1383 = vextract.low.u32 %v1382
    %v1384 = vextract.high.u32 %v1382
    %v1385 = vmul.u32 %v1378, %v1369
    %v1386 = vadd.s32 %v1381, %v1383
    %vm1387 = vc.u32 %v1381, %v1383
    %v1388 = vadd.s32 %v1384, 1
    %v1389 = vsel %vm1387, %v1388, %v1384
    %v1390 = vadd.s32 %v1385, %v1389
    %v1391 = vadd.s32 %v1390, 536870912
    %v1392 = vshrl.u32 %v1391, 30
    %v1393 = vshll.u32 %v1392, 30
    %v1394 = vsub.s32 %v1390, %v1393
    %vm1395 = vcmp.lt.s32.totalorder %v1394, 0
    %v1396 = vsub.s32 0, %v1394
    %v1397 = vsel %vm1395, %v1396, %v1394
    %v1398 = vclz %v1397
    %v1399 = vsub.s32 %v1398, 2
    %vm1400 = vcmp.gt.s32.totalorder 0, %v1399
    %v1401 = vsel %vm1400, 0, %v1399
    %v1402 = vsub.s32 32, %v1401
    %v1403 = vshll.u32 %v1394, %v1401
    %v1404 = vshrl.u32 %v1386, %v1402
    %v1405 = vor.u32 %v1403, %v1404
    %v1406 = vsub.s32 4294967266, %v1401
    %v1407 = vadd.s32 %v1406, 127
    %v1408 = vshll.u32 %v1407, 23
    %v1409 = vor.u32 4788187, %v1408
    %v1410 = vand.u32 2147483647, %v1409
    %v1412 = vcvt.s32.f32 %v1405
    %v1413 = vmul.f32 %v1412, %v1410
    %v1414 = vxor.u32 %v1413, 2147483648
    %v1415 = vsel %vm1332, %v1414, %v1413
    %v1416 = vsub.s32 4, %v1392
    %v1417 = vsel %vm1332, %v1416, %v1392
    %v1418 = vsel %vm1331, %v1312, %v1415
    %v1419 = vsel %vm1331, 0, %v1417
    %v1420 = vcosq.f32.pop %v1418
    %v1421 = vsinq.f32.pop %v1418
    %vm1422 = vweird.f32 %v1312
    %v1423 = vadd.s32 %v1419, 3
    %v1424 = vand.u32 %v1423, 3
    %vm1425 = vcmp.lt.s32.totalorder %v1424, 2
    %vm1426 = vcmp.eq.s32.totalorder %v1424, 0
    %v1427 = vxor.u32 %v1421, 2147483648
    %v1428 = vsel %vm1426, %v1420, %v1427
    %vm1429 = vcmp.eq.s32.totalorder %v1424, 2
    %v1430 = vxor.u32 %v1420, 2147483648
    %v1431 = vsel %vm1429, %v1430, %v1421
    %v1432 = vsel %vm1425, %v1428, %v1431
    %v1433 = vsel %vm1422, nan, %v1432
    %v1434 = vand.u32 2147483647, %v1317
    %vm1435 = vcmp.le.f32.partialorder %v1434, 0.7853982
    %vm1436 = vcmp.lt.s32.totalorder %v1317, 0
    %v1437 = vand.u32 %v1317, 2139095040
    %v1438 = vshrl.u32 %v1437, 23
    %v1439 = vsub.s32 %v1438, 127
    %v1440 = vand.u32 2147483647, %v1317
    %v1441 = vand.u32 %v1440, 8388607
    %v1442 = vor.u32 %v1441, 8388608
    %v1443 = vsub.s32 0, %v1442
    %v1444 = vadd.s32 %v1439, 1
    %vm1445 = vcmp.gt.s32.totalorder %v1444, 0
    %v1446 = vsel %vm1445, %v1444, 0
    %v1447 = vshrl.u32 %v1446, 5
    %v1448 = vand.u32 %v1446, 31
    %v1449 = vsub.s32 32, %v1448
    %v1450 = vshrl.u32 683565275, %v1449
    %v1451 = vshll.u32 683565275, %v1448
    %v1452 = vshrl.u32 2475754826, %v1449
    %v1453 = vor.u32 %v1451, %v1452
    %v1454 = vshll.u32 2475754826, %v1448
    %v1455 = vshrl.u32 2131351028, %v1449
    %v1456 = vor.u32 %v1454, %v1455
    %v1457 = vshll.u32 2131351028, %v1448
    %v1458 = vshrl.u32 2102212464, %v1449
    %v1459 = vor.u32 %v1457, %v1458
    %v1460 = vshll.u32 2102212464, %v1448
    %v1461 = vshrl.u32 920167782, %v1449
    %v1462 = vor.u32 %v1460, %v1461
    %v1463 = vshll.u32 920167782, %v1448
    %v1464 = vshrl.u32 1326507024, %v1449
    %v1465 = vor.u32 %v1463, %v1464
    %vm1466 = vcmp.lt.s32.totalorder %v1447, 1
    %vm1467 = vcmp.lt.s32.totalorder %v1447, 2
    %vm1468 = vcmp.lt.s32.totalorder %v1447, 3
    %vm1469 = vcmp.lt.s32.totalorder %v1447, 4
    %v1470 = vsel %vm1466, %v1450, %v1453
    %v1471 = vsel %vm1469, %v1459, 2102212464
    %v1472 = vsel %vm1468, %v1456, %v1471
    %v1473 = vsel %vm1467, %v1470, %v1472
    %v1474 = vsel %vm1466, %v1453, %v1456
    %v1475 = vsel %vm1469, %v1462, 920167782
    %v1476 = vsel %vm1468, %v1459, %v1475
    %v1477 = vsel %vm1467, %v1474, %v1476
    %v1478 = vsel %vm1466, %v1456, %v1459
    %v1479 = vsel %vm1469, %v1465, 1326507024
    %v1480 = vsel %vm1468, %v1462, %v1479
    %v1481 = vsel %vm1467, %v1478, %v1480
    %v1482 = vshll.u32 %v1442, 8
    %v1483 = vmul.u32.u64.compose %v1482, %v1481
    %v1484 = vextract.low.u32 %v1483
    %v1485 = vextract.high.u32 %v1483
    %v1486 = vmul.u32.u64.compose %v1482, %v1477
    %v1487 = vextract.low.u32 %v1486
    %v1488 = vextract.high.u32 %v1486
    %v1489 = vmul.u32 %v1482, %v1473
    %v1490 = vadd.s32 %v1485, %v1487
    %vm1491 = vc.u32 %v1485, %v1487
    %v1492 = vadd.s32 %v1488, 1
    %v1493 = vsel %vm1491, %v1492, %v1488
    %v1494 = vadd.s32 %v1489, %v1493
    %v1495 = vadd.s32 %v1494, 536870912
    %v1496 = vshrl.u32 %v1495, 30
    %v1497 = vshll.u32 %v1496, 30
    %v1498 = vsub.s32 %v1494, %v1497
    %vm1499 = vcmp.lt.s32.totalorder %v1498, 0
    %v1500 = vsub.s32 0, %v1498
    %v1501 = vsel %vm1499, %v1500, %v1498
    %v1502 = vclz %v1501
    %v1503 = vsub.s32 %v1502, 2
    %vm1504 = vcmp.gt.s32.totalorder 0, %v1503
    %v1505 = vsel %vm1504, 0, %v1503
    %v1506 = vsub.s32 32, %v1505
    %v1507 = vshll.u32 %v1498, %v1505
    %v1508 = vshrl.u32 %v1490, %v1506
    %v1509 = vor.u32 %v1507, %v1508
    %v1510 = vsub.s32 4294967266, %v1505
    %v1511 = vadd.s32 %v1510, 127
    %v1512 = vshll.u32 %v1511, 23
    %v1513 = vor.u32 4788187, %v1512
    %v1514 = vand.u32 2147483647, %v1513
    %v1516 = vcvt.s32.f32 %v1509
    %v1517 = vmul.f32 %v1516, %v1514
    %v1518 = vxor.u32 %v1517, 2147483648
    %v1519 = vsel %vm1436, %v1518, %v1517
    %v1520 = vsub.s32 4, %v1496
    %v1521 = vsel %vm1436, %v1520, %v1496
    %v1522 = vsel %vm1435, %v1317, %v1519
    %v1523 = vsel %vm1435, 0, %v1521
    %v1524 = vcosq.f32.pop %v1522
    %v1525 = vsinq.f32.pop %v1522
    %vm1526 = vweird.f32 %v1317
    %v1527 = vadd.s32 %v1523, 3
    %v1528 = vand.u32 %v1527, 3
    %vm1529 = vcmp.lt.s32.totalorder %v1528, 2
    %vm1530 = vcmp.eq.s32.totalorder %v1528, 0
    %v1531 = vxor.u32 %v1525, 2147483648
    %v1532 = vsel %vm1530, %v1524, %v1531
    %vm1533 = vcmp.eq.s32.totalorder %v1528, 2
    %v1534 = vxor.u32 %v1524, 2147483648
    %v1535 = vsel %vm1533, %v1534, %v1525
    %v1536 = vsel %vm1529, %v1532, %v1535
    %v1537 = vsel %vm1526, nan, %v1536
    %v1538 = vand.u32 2147483647, %v1322
    %vm1539 = vcmp.le.f32.partialorder %v1538, 0.7853982
    %vm1540 = vcmp.lt.s32.totalorder %v1322, 0
    %v1541 = vand.u32 %v1322, 2139095040
    %v1542 = vshrl.u32 %v1541, 23
    %v1543 = vsub.s32 %v1542, 127
    %v1544 = vand.u32 2147483647, %v1322
    %v1545 = vand.u32 %v1544, 8388607
    %v1546 = vor.u32 %v1545, 8388608
    %v1547 = vsub.s32 0, %v1546
    %v1548 = vadd.s32 %v1543, 1
    %vm1549 = vcmp.gt.s32.totalorder %v1548, 0
    %v1550 = vsel %vm1549, %v1548, 0
    %v1551 = vshrl.u32 %v1550, 5
    %v1552 = vand.u32 %v1550, 31
    %v1553 = vsub.s32 32, %v1552
    %v1554 = vshrl.u32 683565275, %v1553
    %v1555 = vshll.u32 683565275, %v1552
    %v1556 = vshrl.u32 2475754826, %v1553
    %v1557 = vor.u32 %v1555, %v1556
    %v1558 = vshll.u32 2475754826, %v1552
    %v1559 = vshrl.u32 2131351028, %v1553
    %v1560 = vor.u32 %v1558, %v1559
    %v1561 = vshll.u32 2131351028, %v1552
    %v1562 = vshrl.u32 2102212464, %v1553
    %v1563 = vor.u32 %v1561, %v1562
    %v1564 = vshll.u32 2102212464, %v1552
    %v1565 = vshrl.u32 920167782, %v1553
    %v1566 = vor.u32 %v1564, %v1565
    %v1567 = vshll.u32 920167782, %v1552
    %v1568 = vshrl.u32 1326507024, %v1553
    %v1569 = vor.u32 %v1567, %v1568
    %vm1570 = vcmp.lt.s32.totalorder %v1551, 1
    %vm1571 = vcmp.lt.s32.totalorder %v1551, 2
    %vm1572 = vcmp.lt.s32.totalorder %v1551, 3
    %vm1573 = vcmp.lt.s32.totalorder %v1551, 4
    %v1574 = vsel %vm1570, %v1554, %v1557
    %v1575 = vsel %vm1573, %v1563, 2102212464
    %v1576 = vsel %vm1572, %v1560, %v1575
    %v1577 = vsel %vm1571, %v1574, %v1576
    %v1578 = vsel %vm1570, %v1557, %v1560
    %v1579 = vsel %vm1573, %v1566, 920167782
    %v1580 = vsel %vm1572, %v1563, %v1579
    %v1581 = vsel %vm1571, %v1578, %v1580
    %v1582 = vsel %vm1570, %v1560, %v1563
    %v1583 = vsel %vm1573, %v1569, 1326507024
    %v1584 = vsel %vm1572, %v1566, %v1583
    %v1585 = vsel %vm1571, %v1582, %v1584
    %v1586 = vshll.u32 %v1546, 8
    %v1587 = vmul.u32.u64.compose %v1586, %v1585
    %v1588 = vextract.low.u32 %v1587
    %v1589 = vextract.high.u32 %v1587
    %v1590 = vmul.u32.u64.compose %v1586, %v1581
    %v1591 = vextract.low.u32 %v1590
    %v1592 = vextract.high.u32 %v1590
    %v1593 = vmul.u32 %v1586, %v1577
    %v1594 = vadd.s32 %v1589, %v1591
    %vm1595 = vc.u32 %v1589, %v1591
    %v1596 = vadd.s32 %v1592, 1
    %v1597 = vsel %vm1595, %v1596, %v1592
    %v1598 = vadd.s32 %v1593, %v1597
    %v1599 = vadd.s32 %v1598, 536870912
    %v1600 = vshrl.u32 %v1599, 30
    %v1601 = vshll.u32 %v1600, 30
    %v1602 = vsub.s32 %v1598, %v1601
    %vm1603 = vcmp.lt.s32.totalorder %v1602, 0
    %v1604 = vsub.s32 0, %v1602
    %v1605 = vsel %vm1603, %v1604, %v1602
    %v1606 = vclz %v1605
    %v1607 = vsub.s32 %v1606, 2
    %vm1608 = vcmp.gt.s32.totalorder 0, %v1607
    %v1609 = vsel %vm1608, 0, %v1607
    %v1610 = vsub.s32 32, %v1609
    %v1611 = vshll.u32 %v1602, %v1609
    %v1612 = vshrl.u32 %v1594, %v1610
    %v1613 = vor.u32 %v1611, %v1612
    %v1614 = vsub.s32 4294967266, %v1609
    %v1615 = vadd.s32 %v1614, 127
    %v1616 = vshll.u32 %v1615, 23
    %v1617 = vor.u32 4788187, %v1616
    %v1618 = vand.u32 2147483647, %v1617
    %v1620 = vcvt.s32.f32 %v1613
    %v1621 = vmul.f32 %v1620, %v1618
    %v1622 = vxor.u32 %v1621, 2147483648
    %v1623 = vsel %vm1540, %v1622, %v1621
    %v1624 = vsub.s32 4, %v1600
    %v1625 = vsel %vm1540, %v1624, %v1600
    %v1626 = vsel %vm1539, %v1322, %v1623
    %v1627 = vsel %vm1539, 0, %v1625
    %v1628 = vcosq.f32.pop %v1626
    %v1629 = vsinq.f32.pop %v1626
    %vm1630 = vweird.f32 %v1322
    %v1631 = vadd.s32 %v1627, 3
    %v1632 = vand.u32 %v1631, 3
    %vm1633 = vcmp.lt.s32.totalorder %v1632, 2
    %vm1634 = vcmp.eq.s32.totalorder %v1632, 0
    %v1635 = vxor.u32 %v1629, 2147483648
    %v1636 = vsel %vm1634, %v1628, %v1635
    %vm1637 = vcmp.eq.s32.totalorder %v1632, 2
    %v1638 = vxor.u32 %v1628, 2147483648
    %v1639 = vsel %vm1637, %v1638, %v1629
    %v1640 = vsel %vm1633, %v1636, %v1639
    %v1641 = vsel %vm1630, nan, %v1640
    %v1642 = vand.u32 2147483647, %v1327
    %vm1643 = vcmp.le.f32.partialorder %v1642, 0.7853982
    %vm1644 = vcmp.lt.s32.totalorder %v1327, 0
    %v1645 = vand.u32 %v1327, 2139095040
    %v1646 = vshrl.u32 %v1645, 23
    %v1647 = vsub.s32 %v1646, 127
    %v1648 = vand.u32 2147483647, %v1327
    %v1649 = vand.u32 %v1648, 8388607
    %v1650 = vor.u32 %v1649, 8388608
    %v1651 = vsub.s32 0, %v1650
    %v1652 = vadd.s32 %v1647, 1
    %vm1653 = vcmp.gt.s32.totalorder %v1652, 0
    %v1654 = vsel %vm1653, %v1652, 0
    %v1655 = vshrl.u32 %v1654, 5
    %v1656 = vand.u32 %v1654, 31
    %v1657 = vsub.s32 32, %v1656
    %v1658 = vshrl.u32 683565275, %v1657
    %v1659 = vshll.u32 683565275, %v1656
    %v1660 = vshrl.u32 2475754826, %v1657
    %v1661 = vor.u32 %v1659, %v1660
    %v1662 = vshll.u32 2475754826, %v1656
    %v1663 = vshrl.u32 2131351028, %v1657
    %v1664 = vor.u32 %v1662, %v1663
    %v1665 = vshll.u32 2131351028, %v1656
    %v1666 = vshrl.u32 2102212464, %v1657
    %v1667 = vor.u32 %v1665, %v1666
    %v1668 = vshll.u32 2102212464, %v1656
    %v1669 = vshrl.u32 920167782, %v1657
    %v1670 = vor.u32 %v1668, %v1669
    %v1671 = vshll.u32 920167782, %v1656
    %v1672 = vshrl.u32 1326507024, %v1657
    %v1673 = vor.u32 %v1671, %v1672
    %vm1674 = vcmp.lt.s32.totalorder %v1655, 1
    %vm1675 = vcmp.lt.s32.totalorder %v1655, 2
    %vm1676 = vcmp.lt.s32.totalorder %v1655, 3
    %vm1677 = vcmp.lt.s32.totalorder %v1655, 4
    %v1678 = vsel %vm1674, %v1658, %v1661
    %v1679 = vsel %vm1677, %v1667, 2102212464
    %v1680 = vsel %vm1676, %v1664, %v1679
    %v1681 = vsel %vm1675, %v1678, %v1680
    %v1682 = vsel %vm1674, %v1661, %v1664
    %v1683 = vsel %vm1677, %v1670, 920167782
    %v1684 = vsel %vm1676, %v1667, %v1683
    %v1685 = vsel %vm1675, %v1682, %v1684
    %v1686 = vsel %vm1674, %v1664, %v1667
    %v1687 = vsel %vm1677, %v1673, 1326507024
    %v1688 = vsel %vm1676, %v1670, %v1687
    %v1689 = vsel %vm1675, %v1686, %v1688
    %v1690 = vshll.u32 %v1650, 8
    %v1691 = vmul.u32.u64.compose %v1690, %v1689
    %v1692 = vextract.low.u32 %v1691
    %v1693 = vextract.high.u32 %v1691
    %v1694 = vmul.u32.u64.compose %v1690, %v1685
    %v1695 = vextract.low.u32 %v1694
    %v1696 = vextract.high.u32 %v1694
    %v1697 = vmul.u32 %v1690, %v1681
    %v1698 = vadd.s32 %v1693, %v1695
    %vm1699 = vc.u32 %v1693, %v1695
    %v1700 = vadd.s32 %v1696, 1
    %v1701 = vsel %vm1699, %v1700, %v1696
    %v1702 = vadd.s32 %v1697, %v1701
    %v1703 = vadd.s32 %v1702, 536870912
    %v1704 = vshrl.u32 %v1703, 30
    %v1705 = vshll.u32 %v1704, 30
    %v1706 = vsub.s32 %v1702, %v1705
    %vm1707 = vcmp.lt.s32.totalorder %v1706, 0
    %v1708 = vsub.s32 0, %v1706
    %v1709 = vsel %vm1707, %v1708, %v1706
    %v1710 = vclz %v1709
    %v1711 = vsub.s32 %v1710, 2
    %vm1712 = vcmp.gt.s32.totalorder 0, %v1711
    %v1713 = vsel %vm1712, 0, %v1711
    %v1714 = vsub.s32 32, %v1713
    %v1715 = vshll.u32 %v1706, %v1713
    %v1716 = vshrl.u32 %v1698, %v1714
    %v1717 = vor.u32 %v1715, %v1716
    %v1718 = vsub.s32 4294967266, %v1713
    %v1719 = vadd.s32 %v1718, 127
    %v1720 = vshll.u32 %v1719, 23
    %v1721 = vor.u32 4788187, %v1720
    %v1722 = vand.u32 2147483647, %v1721
    %v1724 = vcvt.s32.f32 %v1717
    %v1725 = vmul.f32 %v1724, %v1722
    %v1726 = vxor.u32 %v1725, 2147483648
    %v1727 = vsel %vm1644, %v1726, %v1725
    %v1728 = vsub.s32 4, %v1704
    %v1729 = vsel %vm1644, %v1728, %v1704
    %v1730 = vsel %vm1643, %v1327, %v1727
    %v1731 = vsel %vm1643, 0, %v1729
    %v1732 = vcosq.f32.pop %v1730
    %v1733 = vsinq.f32.pop %v1730
    %vm1734 = vweird.f32 %v1327
    %v1735 = vadd.s32 %v1731, 3
    %v1736 = vand.u32 %v1735, 3
    %vm1737 = vcmp.lt.s32.totalorder %v1736, 2
    %vm1738 = vcmp.eq.s32.totalorder %v1736, 0
    %v1739 = vxor.u32 %v1733, 2147483648
    %v1740 = vsel %vm1738, %v1732, %v1739
    %vm1741 = vcmp.eq.s32.totalorder %v1736, 2
    %v1742 = vxor.u32 %v1732, 2147483648
    %v1743 = vsel %vm1741, %v1742, %v1733
    %v1744 = vsel %vm1737, %v1740, %v1743
    %v1745 = vsel %vm1734, nan, %v1744
    %v1746 = vld [vmem:[%s5] sm:$0x1]
    %v1747 = vld [vmem:[#allocation2] sm:$0x1]
    %1749 = vset.pattern.permute.xlu0 0
    %1750 = vperm.xlu0 %1749, %v1747
    %v1751 = vpop.permute.xlu0 %1750
    %v1753 = vlaneseq
    %v1754 = vshrl.u32 %v1753, 7
    %v1755 = vsub.s32 0, %v1754
    %v1756 = vrot.slane %v1751, %v1755
    %v1758 = vsel %vm146, %v1746, 0
    %1760 = vmatprep.subr.mxu0 0.0
    %1761 = vmatpush1.msra.mxu0 %v1433
    %1762 = vmatprep.subr.mxu0 0.0
    %1763 = vmatpush1.msra.mxu0 %v1537
    %1764 = vmatprep.subr.mxu0 0.0
    %1765 = vmatpush1.msra.mxu0 %v1641
    %1766 = vmatprep.subr.mxu0 0.0
    %1767 = vmatpush1.msra.mxu0 %v1745
    %1768 = vmatprep.subr.mxu0 0.0
    %1769 = vmatpush1.msra.mxu0 0.0
    %1770 = vmatprep.subr.mxu0 0.0
    %1771 = vmatpush1.msra.mxu0 0.0
    %1772 = vmatprep.subr.mxu0 0.0
    %1773 = vmatpush1.msra.mxu0 0.0
    %1774 = vmatprep.subr.mxu0 0.0
    %1775 = vmatpush1.msra.mxu0 0.0
    %1776 = vmatprep.subr.mxu0 0.0
    %1777 = vmatpush1.msra.mxu0 0.0
    %1778 = vmatprep.subr.mxu0 0.0
    %1779 = vmatpush1.msra.mxu0 0.0
    %1780 = vmatprep.subr.mxu0 0.0
    %1781 = vmatpush1.msra.mxu0 0.0
    %1782 = vmatprep.subr.mxu0 0.0
    %1783 = vmatpush1.msra.mxu0 0.0
    %1784 = vmatprep.subr.mxu0 0.0
    %1785 = vmatpush1.msra.mxu0 0.0
    %1786 = vmatprep.subr.mxu0 0.0
    %1787 = vmatpush1.msra.mxu0 0.0
    %1788 = vmatprep.subr.mxu0 0.0
    %1789 = vmatpush1.msra.mxu0 0.0
    %1790 = vmatprep.subr.mxu0 0.0
    %1791 = vmatpush1.msra.mxu0 0.0
    %1792 = vmatprep.subr.mxu0 0.0
    %1793 = vmatpush1.msra.mxu0 0.0
    %1794 = vmatprep.subr.mxu0 0.0
    %1795 = vmatpush1.msra.mxu0 0.0
    %1796 = vmatprep.subr.mxu0 0.0
    %1797 = vmatpush1.msra.mxu0 0.0
    %1798 = vmatprep.subr.mxu0 0.0
    %1799 = vmatpush1.msra.mxu0 0.0
    %1800 = vmatprep.subr.mxu0 0.0
    %1801 = vmatpush1.msra.mxu0 0.0
    %1802 = vmatprep.subr.mxu0 0.0
    %1803 = vmatpush1.msra.mxu0 0.0
    %1804 = vmatprep.subr.mxu0 0.0
    %1805 = vmatpush1.msra.mxu0 0.0
    %1806 = vmatprep.subr.mxu0 0.0
    %1807 = vmatpush1.msra.mxu0 0.0
    %1808 = vmatprep.subr.mxu0 0.0
    %1809 = vmatpush1.msra.mxu0 0.0
    %1810 = vmatprep.subr.mxu0 0.0
    %1811 = vmatpush1.msra.mxu0 0.0
    %1812 = vmatprep.subr.mxu0 0.0
    %1813 = vmatpush1.msra.mxu0 0.0
    %1814 = vmatprep.subr.mxu0 0.0
    %1815 = vmatpush1.msra.mxu0 0.0
    %1816 = vmatprep.subr.mxu0 0.0
    %1817 = vmatpush1.msra.mxu0 0.0
    %1818 = vmatprep.subr.mxu0 0.0
    %1819 = vmatpush1.msra.mxu0 0.0
    %1820 = vmatprep.subr.mxu0 0.0
    %1821 = vmatpush1.msra.mxu0 0.0
    %1822 = vmatprep.subr.mxu0 0.0
    %1823 = vmatpush1.msra.mxu0 0.0
    %1824 = vmatprep.mubr.f32.mxu0 0.0
    %1825 = vmatmul.mubr.f32.gmra.mrb[0].mxu0 %v1758
    %v1826 = vpop.f32.mrb[0].mxu0
    %v1827 = vadd.f32 %v1756, %v1826
    %v1828 = vpop.f32.mrb[0].mxu0
    %1829 = vdwg.mxu0
    %1830 = vst [vmem:[#allocation3] sm:$0x1] %v1827
    // Predicated region
    $region30: #{tpu_custom_call.1} parent=1 // pred_check
      _
    $region31: #{tpu_custom_call.1} parent=1 // pred_check_branch
      %1832 = sbr.rel (0) target = $region33
    $region32: #{tpu_custom_call.1} parent=1 // pred_region
      %s1834 = ssub.s32 16, 16
      %1835 = vsyncadd [#allocation4], %s1834
      %s1837 = sshll.u32 [#allocation3], 4
      %s1838 = int_to_ptr.vmem [resolvable:$true] %s1837
      %1840 = dma.vmem_to_hbm [thread:$0]  %s1838, 16, %s7, [#allocation4]
    $region33: #{tpu_custom_call.1} parent=1 // pred_fallthru
      _
    // Predicated region
    $region34: #{tpu_custom_call.1} parent=1 // pred_check
      _
    $region35: #{tpu_custom_call.1} parent=1 // pred_check_branch
      %1842 = sbr.rel (0) target = $region37
    $region36: #{tpu_custom_call.1} parent=1 // pred_region
      %1843 = dma.done [#allocation4], 16
    $region37: #{tpu_custom_call.1} parent=1 // pred_fallthru
      _
    %1844 = vsyncpa [#allocation4], 1

</llo_original>
